<compile_context>
chip_gen: v7x
topology: tpu7x:2x2x1
jax: 0.10.0
libtpu: 0.0.40
codegen_flags: <defaults>
</compile_context>

<pallas_src>
import functools
import math

import jax
import jax.numpy as jnp
from jax.experimental import pallas as pl
from jax.experimental.pallas import tpu as pltpu

_VMEM_LIMIT = 32 * 1024 * 1024  # safe on v5e/v6e/v7x; tiles here are tiny anyway


# ---------------------------------------------------------------------------
# Fused multi-head-attention block kernel:
#   q/kv projection -> per-head scaled-dot-product attention -> output
#   projection -> residual add -> LayerNorm
# One grid step = one batch element (all heads handled inside).
# ---------------------------------------------------------------------------

def _mha_block_kernel(xq_ref, xkv_ref, m_ref,
                      wq_ref, bq_ref, wkv_ref, bkv_ref, wo_ref, bo_ref,
                      g_ref, beta_ref, o_ref, *, num_heads, scale):
    xq = xq_ref[0]            # (Sq, D)  f32 (also the residual)
    xkv = xkv_ref[0]          # (Sk, D)  f32
    mask = m_ref[0]           # (Sq, Sk) f32 {0, 1}

    D = xq.shape[-1]
    dk = D // num_heads

    # Projections: bf16 operands, f32 accumulation.
    q = jnp.dot(xq.astype(jnp.bfloat16), wq_ref[...],
                preferred_element_type=jnp.float32) + bq_ref[...]
    kv = jnp.dot(xkv.astype(jnp.bfloat16), wkv_ref[...],
                 preferred_element_type=jnp.float32) + bkv_ref[...]
    k = kv[:, :D]
    v = kv[:, D:]

    # Fold the 1/sqrt(dk) scale into Q once (f32) instead of per-head scores.
    q = (q * scale).astype(jnp.bfloat16)
    k = k.astype(jnp.bfloat16)
    v = v.astype(jnp.bfloat16)

    neg_mask = jnp.where(mask == 0.0, -1e9, 0.0)            # (Sq, Sk) f32

    # All heads inside this single kernel invocation (static unroll).
    ctx_parts = []
    for h in range(num_heads):
        sl = slice(h * dk, (h + 1) * dk)
        qh, kh, vh = q[:, sl], k[:, sl], v[:, sl]            # (Sq,dk),(Sk,dk),(Sk,dk)
        # scores = (qh * scale) @ kh^T  (contraction over dk), f32 accumulation
        s = jax.lax.dot_general(qh, kh, (((1,), (1,)), ((), ())),
                                preferred_element_type=jnp.float32)
        s = s + neg_mask                                     # masked_fill(mask==0, -1e9)
        s = s - jnp.max(s, axis=-1, keepdims=True)
        p = jnp.exp(s)                                       # softmax stats in f32
        p = p * pl.reciprocal(jnp.sum(p, axis=-1, keepdims=True), approx=True)
        ctx_parts.append(jnp.dot(p.astype(jnp.bfloat16), vh,
                                 preferred_element_type=jnp.float32))
    ctx = jnp.concatenate(ctx_parts, axis=-1)                # (Sq, D) f32, heads merged

    attn = jnp.dot(ctx.astype(jnp.bfloat16), wo_ref[...],
                   preferred_element_type=jnp.float32) + bo_ref[...]

    # residual add + LayerNorm (biased variance, like nn.LayerNorm), all f32
    y = xq + attn
    mu = jnp.mean(y, axis=-1, keepdims=True)
    var = jnp.mean((y - mu) ** 2, axis=-1, keepdims=True)
    o_ref[0] = (y - mu) * jax.lax.rsqrt(var + 1e-5) * g_ref[...] + beta_ref[...]


def mha_block(x_q, x_kv, mask_bqk, p, gamma, beta, num_heads):
    B, Sq, D = x_q.shape
    Sk = x_kv.shape[1]
    assert D % num_heads == 0
    kernel = functools.partial(_mha_block_kernel, num_heads=num_heads,
                               scale=1.0 / math.sqrt(D // num_heads))
    return pl.pallas_call(
        kernel,
        grid=(B,),
        in_specs=[
            pl.BlockSpec((1, Sq, D), lambda b: (b, 0, 0)),      # x_q
            pl.BlockSpec((1, Sk, D), lambda b: (b, 0, 0)),      # x_kv
            pl.BlockSpec((1, Sq, Sk), lambda b: (b, 0, 0)),     # mask (per-batch)
            pl.BlockSpec((D, D), lambda b: (0, 0)),             # wq (bf16, resident)
            pl.BlockSpec((1, D), lambda b: (0, 0)),             # bq
            pl.BlockSpec((D, 2 * D), lambda b: (0, 0)),         # wkv (bf16, resident)
            pl.BlockSpec((1, 2 * D), lambda b: (0, 0)),         # bkv
            pl.BlockSpec((D, D), lambda b: (0, 0)),             # wo (bf16, resident)
            pl.BlockSpec((1, D), lambda b: (0, 0)),             # bo
            pl.BlockSpec((1, D), lambda b: (0, 0)),             # LN gamma
            pl.BlockSpec((1, D), lambda b: (0, 0)),             # LN beta
        ],
        out_specs=pl.BlockSpec((1, Sq, D), lambda b: (b, 0, 0)),
        out_shape=jax.ShapeDtypeStruct((B, Sq, D), jnp.float32),
        compiler_params=pltpu.CompilerParams(
            dimension_semantics=("parallel",),                  # batch is independent
            vmem_limit_bytes=_VMEM_LIMIT,
        ),
    )(x_q, x_kv, mask_bqk,
      p["wq"], p["bq"], p["wkv"], p["bkv"], p["wo"], p["bo"], gamma, beta)


# ---------------------------------------------------------------------------
# Fused FFN block kernel: x @ w1 -> ReLU -> @ w2 + residual add + LayerNorm
# Grid tiles the M = B*S dimension; weights stay VMEM-resident across tiles.
# ---------------------------------------------------------------------------

def _ffn_block_kernel(x_ref, w1_ref, b1_ref, w2_ref, b2_ref, g_ref, beta_ref, o_ref):
    x = x_ref[...]                                             # (tm, D) f32 (residual)
    h = jnp.dot(x.astype(jnp.bfloat16), w1_ref[...],
                preferred_element_type=jnp.float32) + b1_ref[...]
    h = jnp.maximum(h, 0.0)                                    # ReLU
    f = jnp.dot(h.astype(jnp.bfloat16), w2_ref[...],
                preferred_element_type=jnp.float32) + b2_ref[...]
    y = x + f
    mu = jnp.mean(y, axis=-1, keepdims=True)
    var = jnp.mean((y - mu) ** 2, axis=-1, keepdims=True)
    o_ref[...] = (y - mu) * jax.lax.rsqrt(var + 1e-5) * g_ref[...] + beta_ref[...]


def _pick_tile_m(M, max_tile=512):
    """Largest multiple of 8 that divides M, is <= max_tile, and gives >= 2 tiles."""
    if M % 8 != 0 or M <= 8:
        return M
    best = 8
    for tm in range(8, min(M, max_tile) + 1, 8):
        if M % tm == 0 and M // tm >= 2:
            best = tm
    return best


def ffn_block(x, w1, b1, w2, b2, gamma, beta):
    B, S, D = x.shape
    M = B * S
    F = w1.shape[1]
    tm = _pick_tile_m(M)
    x2 = x.reshape(M, D)
    out = pl.pallas_call(
        _ffn_block_kernel,
        grid=(M // tm,),
        in_specs=[
            pl.BlockSpec((tm, D), lambda i: (i, 0)),            # activations (tiled)
            pl.BlockSpec((D, F), lambda i: (0, 0)),             # w1 (bf16, resident)
            pl.BlockSpec((1, F), lambda i: (0, 0)),             # b1
            pl.BlockSpec((F, D), lambda i: (0, 0)),             # w2 (bf16, resident)
            pl.BlockSpec((1, D), lambda i: (0, 0)),             # b2
            pl.BlockSpec((1, D), lambda i: (0, 0)),             # LN gamma
            pl.BlockSpec((1, D), lambda i: (0, 0)),             # LN beta
        ],
        out_specs=pl.BlockSpec((tm, D), lambda i: (i, 0)),
        out_shape=jax.ShapeDtypeStruct((M, D), jnp.float32),
        compiler_params=pltpu.CompilerParams(
            dimension_semantics=("parallel",),                  # M tiles independent
            vmem_limit_bytes=_VMEM_LIMIT,
        ),
    )(x2, w1, b1, w2, b2, gamma, beta)
    return out.reshape(B, S, D)


# ---------------------------------------------------------------------------
# Decoder layer = exactly three fused pallas_call launches
# ---------------------------------------------------------------------------

def _prep_mask(mask, B, Sq, Sk):
    # Collapse to a per-batch (Sq, Sk) float mask; masks must not vary by head
    # (true for the reference module's causal / padding masks).
    m = jnp.broadcast_to(mask.astype(jnp.float32), (B, 1, Sq, Sk))
    return m.reshape(B, Sq, Sk)


def decoder_layer(x, enc_output, src_mask, tgt_mask, params, num_heads):
    B, Sq, D = x.shape
    Sk = enc_output.shape[1]
    tgt_m = _prep_mask(tgt_mask, B, Sq, Sq)
    src_m = _prep_mask(src_mask, B, Sq, Sk)

    # self-attention + add & norm   (dropout = identity in eval mode)
    x = mha_block(x, x, tgt_m, params["self_attn"],
                  params["norm1_g"], params["norm1_b"], num_heads)
    # cross-attention + add & norm
    x = mha_block(x, enc_output, src_m, params["cross_attn"],
                  params["norm2_g"], params["norm2_b"], num_heads)
    # feed-forward + add & norm
    x = ffn_block(x, params["ff_w1"], params["ff_b1"],
                  params["ff_w2"], params["ff_b2"],
                  params["norm3_g"], params["norm3_b"])
    return x


# ---------------------------------------------------------------------------
# Deterministic parameter init (matmul weights stored in bf16; K|V fused)
# ---------------------------------------------------------------------------

def init_mha_params(key, d_model):
    ks = jax.random.split(key, 4)

    def lin(k, shape):
        return 0.02 * jax.random.normal(k, shape, jnp.float32)

    wq = lin(ks[0], (d_model, d_model))
    wk = lin(ks[1], (d_model, d_model))
    wv = lin(ks[2], (d_model, d_model))
    wo = lin(ks[3], (d_model, d_model))
    return {
        "wq": wq.astype(jnp.bfloat16),
        "bq": jnp.zeros((1, d_model), jnp.float32),
        "wkv": jnp.concatenate([wk, wv], axis=1).astype(jnp.bfloat16),
        "bkv": jnp.zeros((1, 2 * d_model), jnp.float32),
        "wo": wo.astype(jnp.bfloat16),
        "bo": jnp.zeros((1, d_model), jnp.float32),
    }


def init_decoder_params(key, d_model, d_ff):
    k1, k2, k3, k4 = jax.random.split(key, 4)
    return {
        "self_attn": init_mha_params(k1, d_model),
        "cross_attn": init_mha_params(k2, d_model),
        "ff_w1": (0.02 * jax.random.normal(k3, (d_model, d_ff), jnp.float32)
                  ).astype(jnp.bfloat16),
        "ff_b1": jnp.zeros((1, d_ff), jnp.float32),
        "ff_w2": (0.02 * jax.random.normal(k4, (d_ff, d_model), jnp.float32)
                  ).astype(jnp.bfloat16),
        "ff_b2": jnp.zeros((1, d_model), jnp.float32),
        "norm1_g": jnp.ones((1, d_model), jnp.float32),
        "norm1_b": jnp.zeros((1, d_model), jnp.float32),
        "norm2_g": jnp.ones((1, d_model), jnp.float32),
        "norm2_b": jnp.zeros((1, d_model), jnp.float32),
        "norm3_g": jnp.ones((1, d_model), jnp.float32),
        "norm3_b": jnp.zeros((1, d_model), jnp.float32),
    }


# ---------------------------------------------------------------------------
# Main
# ---------------------------------------------------------------------------

if __name__ == "__main__":
    B, S_tgt, S_src = 2, 8, 8
    d_model, num_heads, d_ff = 32, 4, 64

    key = jax.random.PRNGKey(0)
    kx, ke, kp = jax.random.split(key, 3)

    x = jax.random.normal(kx, (B, S_tgt, d_model), jnp.float32)
    enc_output = jax.random.normal(ke, (B, S_src, d_model), jnp.float32)

    # tgt_mask: causal (1, 1, S_tgt, S_tgt); src_mask: all-valid (B, 1, 1, S_src)
    tgt_mask = jnp.tril(jnp.ones((S_tgt, S_tgt), jnp.float32))[None, None]
    src_mask = jnp.ones((B, 1, 1, S_src), jnp.float32)

    params = init_decoder_params(kp, d_model, d_ff)

    out = decoder_layer(x, enc_output, src_mask, tgt_mask, params, num_heads)
    out = jax.block_until_ready(out)
    assert out.shape == (B, S_tgt, d_model)
    assert bool(jnp.all(jnp.isfinite(out)))
    print("KERNEL_OK")
</pallas_src>

<mosaic_0001>
module attributes {stable_mosaic.version = 11 : i64} {
  func.func @_mha_block_kernel(%arg0: i32, %arg1: memref<1x8x32xf32, #tpu.memory_space<vmem>>, %arg2: memref<1x8x32xf32, #tpu.memory_space<vmem>>, %arg3: memref<1x8x8xf32, #tpu.memory_space<vmem>>, %arg4: memref<32x32xbf16, #tpu.memory_space<vmem>>, %arg5: memref<1x32xf32, #tpu.memory_space<vmem>>, %arg6: memref<32x64xbf16, #tpu.memory_space<vmem>>, %arg7: memref<1x64xf32, #tpu.memory_space<vmem>>, %arg8: memref<32x32xbf16, #tpu.memory_space<vmem>>, %arg9: memref<1x32xf32, #tpu.memory_space<vmem>>, %arg10: memref<1x32xf32, #tpu.memory_space<vmem>>, %arg11: memref<1x32xf32, #tpu.memory_space<vmem>>, %arg12: memref<1x8x32xf32, #tpu.memory_space<vmem>>) attributes {dimension_semantics = [#tpu.dimension_semantics<parallel>], iteration_bounds = array<i64: 2>, scalar_prefetch = 0 : i64, scratch_operands = 0 : i64, tpu.core_type = #tpu.core_type<tc>, window_params = [{transform_indices = @transform_0, window_bounds = array<i64: 1, 8, 32>}, {transform_indices = @transform_1, window_bounds = array<i64: 1, 8, 32>}, {transform_indices = @transform_2, window_bounds = array<i64: 1, 8, 8>}, {pipeline_mode = #tpu.pipeline_mode<synchronous>, transform_indices = @transform_3, window_bounds = array<i64: 32, 32>}, {pipeline_mode = #tpu.pipeline_mode<synchronous>, transform_indices = @transform_4, window_bounds = array<i64: 1, 32>}, {pipeline_mode = #tpu.pipeline_mode<synchronous>, transform_indices = @transform_5, window_bounds = array<i64: 32, 64>}, {pipeline_mode = #tpu.pipeline_mode<synchronous>, transform_indices = @transform_6, window_bounds = array<i64: 1, 64>}, {pipeline_mode = #tpu.pipeline_mode<synchronous>, transform_indices = @transform_7, window_bounds = array<i64: 32, 32>}, {pipeline_mode = #tpu.pipeline_mode<synchronous>, transform_indices = @transform_8, window_bounds = array<i64: 1, 32>}, {pipeline_mode = #tpu.pipeline_mode<synchronous>, transform_indices = @transform_9, window_bounds = array<i64: 1, 32>}, {pipeline_mode = #tpu.pipeline_mode<synchronous>, transform_indices = @transform_10, window_bounds = array<i64: 1, 32>}, {transform_indices = @transform_11, window_bounds = array<i64: 1, 8, 32>}]} {
    %c0 = arith.constant 0 : index
    %c0_0 = arith.constant 0 : index
    %c0_1 = arith.constant 0 : index
    %0 = vector.load %arg1[%c0, %c0_0, %c0_1] : memref<1x8x32xf32, #tpu.memory_space<vmem>>, vector<1x8x32xf32>
    %1 = vector.shape_cast %0 : vector<1x8x32xf32> to vector<8x32xf32>
    %c0_2 = arith.constant 0 : index
    %c0_3 = arith.constant 0 : index
    %c0_4 = arith.constant 0 : index
    %2 = vector.load %arg2[%c0_2, %c0_3, %c0_4] : memref<1x8x32xf32, #tpu.memory_space<vmem>>, vector<1x8x32xf32>
    %3 = vector.shape_cast %2 : vector<1x8x32xf32> to vector<8x32xf32>
    %c0_5 = arith.constant 0 : index
    %c0_6 = arith.constant 0 : index
    %c0_7 = arith.constant 0 : index
    %4 = vector.load %arg3[%c0_5, %c0_6, %c0_7] : memref<1x8x8xf32, #tpu.memory_space<vmem>>, vector<1x8x8xf32>
    %5 = vector.shape_cast %4 : vector<1x8x8xf32> to vector<8x8xf32>
    %6 = arith.truncf %1 : vector<8x32xf32> to vector<8x32xbf16>
    %c0_8 = arith.constant 0 : index
    %c0_9 = arith.constant 0 : index
    %7 = vector.load %arg4[%c0_8, %c0_9] : memref<32x32xbf16, #tpu.memory_space<vmem>>, vector<32x32xbf16>
    %cst = arith.constant dense<0.000000e+00> : vector<8x32xf32>
    %8 = tpu.matmul %6, %7, %cst {dimension_numbers = #tpu.dot_dimension_numbers<[1], [0], [0], [1], [0, 0, 1, 1], [], []>} : vector<8x32xbf16>, vector<32x32xbf16>, vector<8x32xf32> -> vector<8x32xf32>
    %c0_10 = arith.constant 0 : index
    %c0_11 = arith.constant 0 : index
    %9 = vector.load %arg5[%c0_10, %c0_11] : memref<1x32xf32, #tpu.memory_space<vmem>>, vector<1x32xf32>
    %10 = vector.broadcast %9 : vector<1x32xf32> to vector<8x32xf32>
    %11 = arith.addf %8, %10 : vector<8x32xf32>
    %12 = arith.truncf %3 : vector<8x32xf32> to vector<8x32xbf16>
    %c0_12 = arith.constant 0 : index
    %c0_13 = arith.constant 0 : index
    %13 = vector.load %arg6[%c0_12, %c0_13] : memref<32x64xbf16, #tpu.memory_space<vmem>>, vector<32x64xbf16>
    %cst_14 = arith.constant dense<0.000000e+00> : vector<8x64xf32>
    %14 = tpu.matmul %12, %13, %cst_14 {dimension_numbers = #tpu.dot_dimension_numbers<[1], [0], [0], [1], [0, 0, 1, 1], [], []>} : vector<8x32xbf16>, vector<32x64xbf16>, vector<8x64xf32> -> vector<8x64xf32>
    %c0_15 = arith.constant 0 : index
    %c0_16 = arith.constant 0 : index
    %15 = vector.load %arg7[%c0_15, %c0_16] : memref<1x64xf32, #tpu.memory_space<vmem>>, vector<1x64xf32>
    %16 = vector.broadcast %15 : vector<1x64xf32> to vector<8x64xf32>
    %17 = arith.addf %14, %16 : vector<8x64xf32>
    %18 = vector.extract_strided_slice %17 {offsets = [0, 0], sizes = [8, 32], strides = [1, 1]} : vector<8x64xf32> to vector<8x32xf32>
    %19 = vector.extract_strided_slice %17 {offsets = [0, 32], sizes = [8, 32], strides = [1, 1]} : vector<8x64xf32> to vector<8x32xf32>
    %cst_17 = arith.constant 0.353553385 : f32
    %20 = vector.broadcast %cst_17 : f32 to vector<8x32xf32>
    %21 = arith.mulf %11, %20 : vector<8x32xf32>
    %22 = arith.truncf %21 : vector<8x32xf32> to vector<8x32xbf16>
    %23 = arith.truncf %18 : vector<8x32xf32> to vector<8x32xbf16>
    %24 = arith.truncf %19 : vector<8x32xf32> to vector<8x32xbf16>
    %cst_18 = arith.constant 0.000000e+00 : f32
    %25 = vector.broadcast %cst_18 : f32 to vector<8x8xf32>
    %26 = arith.cmpf oeq, %5, %25 : vector<8x8xf32>
    %cst_19 = arith.constant -1.000000e+09 : f32
    %cst_20 = arith.constant 0.000000e+00 : f32
    %27 = vector.broadcast %cst_19 : f32 to vector<8x8xf32>
    %28 = vector.broadcast %cst_20 : f32 to vector<8x8xf32>
    %29 = arith.select %26, %27, %28 : vector<8x8xi1>, vector<8x8xf32>
    %30 = vector.extract_strided_slice %22 {offsets = [0, 0], sizes = [8, 8], strides = [1, 1]} : vector<8x32xbf16> to vector<8x8xbf16>
    %31 = vector.extract_strided_slice %23 {offsets = [0, 0], sizes = [8, 8], strides = [1, 1]} : vector<8x32xbf16> to vector<8x8xbf16>
    %32 = vector.extract_strided_slice %24 {offsets = [0, 0], sizes = [8, 8], strides = [1, 1]} : vector<8x32xbf16> to vector<8x8xbf16>
    %cst_21 = arith.constant dense<0.000000e+00> : vector<8x8xf32>
    %33 = tpu.matmul %30, %31, %cst_21 {dimension_numbers = #tpu.dot_dimension_numbers<[1], [1], [0], [0], [0, 0, 1, 0], [], []>} : vector<8x8xbf16>, vector<8x8xbf16>, vector<8x8xf32> -> vector<8x8xf32>
    %34 = arith.addf %33, %29 : vector<8x8xf32>
    %cst_22 = arith.constant dense<0xFF800000> : vector<8xf32>
    %35 = vector.multi_reduction <maximumf>, %34, %cst_22 [1] : vector<8x8xf32> to vector<8xf32>
    %36 = vector.shape_cast %35 : vector<8xf32> to vector<8x1xf32>
    %37 = vector.broadcast %36 : vector<8x1xf32> to vector<8x8xf32>
    %38 = arith.subf %34, %37 : vector<8x8xf32>
    %39 = math.exp %38 : vector<8x8xf32>
    %cst_23 = arith.constant dense<0.000000e+00> : vector<8xf32>
    %40 = vector.multi_reduction <add>, %39, %cst_23 [1] : vector<8x8xf32> to vector<8xf32>
    %41 = vector.shape_cast %40 : vector<8xf32> to vector<8x1xf32>
    %42 = tpu.reciprocal %41 {approx = true} : vector<8x1xf32> -> vector<8x1xf32>
    %43 = vector.broadcast %42 : vector<8x1xf32> to vector<8x8xf32>
    %44 = arith.mulf %39, %43 : vector<8x8xf32>
    %45 = arith.truncf %44 : vector<8x8xf32> to vector<8x8xbf16>
    %cst_24 = arith.constant dense<0.000000e+00> : vector<8x8xf32>
    %46 = tpu.matmul %45, %32, %cst_24 {dimension_numbers = #tpu.dot_dimension_numbers<[1], [0], [0], [1], [0, 0, 1, 1], [], []>} : vector<8x8xbf16>, vector<8x8xbf16>, vector<8x8xf32> -> vector<8x8xf32>
    %47 = vector.extract_strided_slice %22 {offsets = [0, 8], sizes = [8, 8], strides = [1, 1]} : vector<8x32xbf16> to vector<8x8xbf16>
    %48 = vector.extract_strided_slice %23 {offsets = [0, 8], sizes = [8, 8], strides = [1, 1]} : vector<8x32xbf16> to vector<8x8xbf16>
    %49 = vector.extract_strided_slice %24 {offsets = [0, 8], sizes = [8, 8], strides = [1, 1]} : vector<8x32xbf16> to vector<8x8xbf16>
    %cst_25 = arith.constant dense<0.000000e+00> : vector<8x8xf32>
    %50 = tpu.matmul %47, %48, %cst_25 {dimension_numbers = #tpu.dot_dimension_numbers<[1], [1], [0], [0], [0, 0, 1, 0], [], []>} : vector<8x8xbf16>, vector<8x8xbf16>, vector<8x8xf32> -> vector<8x8xf32>
    %51 = arith.addf %50, %29 : vector<8x8xf32>
    %cst_26 = arith.constant dense<0xFF800000> : vector<8xf32>
    %52 = vector.multi_reduction <maximumf>, %51, %cst_26 [1] : vector<8x8xf32> to vector<8xf32>
    %53 = vector.shape_cast %52 : vector<8xf32> to vector<8x1xf32>
    %54 = vector.broadcast %53 : vector<8x1xf32> to vector<8x8xf32>
    %55 = arith.subf %51, %54 : vector<8x8xf32>
    %56 = math.exp %55 : vector<8x8xf32>
    %cst_27 = arith.constant dense<0.000000e+00> : vector<8xf32>
    %57 = vector.multi_reduction <add>, %56, %cst_27 [1] : vector<8x8xf32> to vector<8xf32>
    %58 = vector.shape_cast %57 : vector<8xf32> to vector<8x1xf32>
    %59 = tpu.reciprocal %58 {approx = true} : vector<8x1xf32> -> vector<8x1xf32>
    %60 = vector.broadcast %59 : vector<8x1xf32> to vector<8x8xf32>
    %61 = arith.mulf %56, %60 : vector<8x8xf32>
    %62 = arith.truncf %61 : vector<8x8xf32> to vector<8x8xbf16>
    %cst_28 = arith.constant dense<0.000000e+00> : vector<8x8xf32>
    %63 = tpu.matmul %62, %49, %cst_28 {dimension_numbers = #tpu.dot_dimension_numbers<[1], [0], [0], [1], [0, 0, 1, 1], [], []>} : vector<8x8xbf16>, vector<8x8xbf16>, vector<8x8xf32> -> vector<8x8xf32>
    %64 = vector.extract_strided_slice %22 {offsets = [0, 16], sizes = [8, 8], strides = [1, 1]} : vector<8x32xbf16> to vector<8x8xbf16>
    %65 = vector.extract_strided_slice %23 {offsets = [0, 16], sizes = [8, 8], strides = [1, 1]} : vector<8x32xbf16> to vector<8x8xbf16>
    %66 = vector.extract_strided_slice %24 {offsets = [0, 16], sizes = [8, 8], strides = [1, 1]} : vector<8x32xbf16> to vector<8x8xbf16>
    %cst_29 = arith.constant dense<0.000000e+00> : vector<8x8xf32>
    %67 = tpu.matmul %64, %65, %cst_29 {dimension_numbers = #tpu.dot_dimension_numbers<[1], [1], [0], [0], [0, 0, 1, 0], [], []>} : vector<8x8xbf16>, vector<8x8xbf16>, vector<8x8xf32> -> vector<8x8xf32>
    %68 = arith.addf %67, %29 : vector<8x8xf32>
    %cst_30 = arith.constant dense<0xFF800000> : vector<8xf32>
    %69 = vector.multi_reduction <maximumf>, %68, %cst_30 [1] : vector<8x8xf32> to vector<8xf32>
    %70 = vector.shape_cast %69 : vector<8xf32> to vector<8x1xf32>
    %71 = vector.broadcast %70 : vector<8x1xf32> to vector<8x8xf32>
    %72 = arith.subf %68, %71 : vector<8x8xf32>
    %73 = math.exp %72 : vector<8x8xf32>
    %cst_31 = arith.constant dense<0.000000e+00> : vector<8xf32>
    %74 = vector.multi_reduction <add>, %73, %cst_31 [1] : vector<8x8xf32> to vector<8xf32>
    %75 = vector.shape_cast %74 : vector<8xf32> to vector<8x1xf32>
    %76 = tpu.reciprocal %75 {approx = true} : vector<8x1xf32> -> vector<8x1xf32>
    %77 = vector.broadcast %76 : vector<8x1xf32> to vector<8x8xf32>
    %78 = arith.mulf %73, %77 : vector<8x8xf32>
    %79 = arith.truncf %78 : vector<8x8xf32> to vector<8x8xbf16>
    %cst_32 = arith.constant dense<0.000000e+00> : vector<8x8xf32>
    %80 = tpu.matmul %79, %66, %cst_32 {dimension_numbers = #tpu.dot_dimension_numbers<[1], [0], [0], [1], [0, 0, 1, 1], [], []>} : vector<8x8xbf16>, vector<8x8xbf16>, vector<8x8xf32> -> vector<8x8xf32>
    %81 = vector.extract_strided_slice %22 {offsets = [0, 24], sizes = [8, 8], strides = [1, 1]} : vector<8x32xbf16> to vector<8x8xbf16>
    %82 = vector.extract_strided_slice %23 {offsets = [0, 24], sizes = [8, 8], strides = [1, 1]} : vector<8x32xbf16> to vector<8x8xbf16>
    %83 = vector.extract_strided_slice %24 {offsets = [0, 24], sizes = [8, 8], strides = [1, 1]} : vector<8x32xbf16> to vector<8x8xbf16>
    %cst_33 = arith.constant dense<0.000000e+00> : vector<8x8xf32>
    %84 = tpu.matmul %81, %82, %cst_33 {dimension_numbers = #tpu.dot_dimension_numbers<[1], [1], [0], [0], [0, 0, 1, 0], [], []>} : vector<8x8xbf16>, vector<8x8xbf16>, vector<8x8xf32> -> vector<8x8xf32>
    %85 = arith.addf %84, %29 : vector<8x8xf32>
    %cst_34 = arith.constant dense<0xFF800000> : vector<8xf32>
    %86 = vector.multi_reduction <maximumf>, %85, %cst_34 [1] : vector<8x8xf32> to vector<8xf32>
    %87 = vector.shape_cast %86 : vector<8xf32> to vector<8x1xf32>
    %88 = vector.broadcast %87 : vector<8x1xf32> to vector<8x8xf32>
    %89 = arith.subf %85, %88 : vector<8x8xf32>
    %90 = math.exp %89 : vector<8x8xf32>
    %cst_35 = arith.constant dense<0.000000e+00> : vector<8xf32>
    %91 = vector.multi_reduction <add>, %90, %cst_35 [1] : vector<8x8xf32> to vector<8xf32>
    %92 = vector.shape_cast %91 : vector<8xf32> to vector<8x1xf32>
    %93 = tpu.reciprocal %92 {approx = true} : vector<8x1xf32> -> vector<8x1xf32>
    %94 = vector.broadcast %93 : vector<8x1xf32> to vector<8x8xf32>
    %95 = arith.mulf %90, %94 : vector<8x8xf32>
    %96 = arith.truncf %95 : vector<8x8xf32> to vector<8x8xbf16>
    %cst_36 = arith.constant dense<0.000000e+00> : vector<8x8xf32>
    %97 = tpu.matmul %96, %83, %cst_36 {dimension_numbers = #tpu.dot_dimension_numbers<[1], [0], [0], [1], [0, 0, 1, 1], [], []>} : vector<8x8xbf16>, vector<8x8xbf16>, vector<8x8xf32> -> vector<8x8xf32>
    %98 = tpu.concatenate %46, %63, %80, %97 in 1 : vector<8x8xf32>, vector<8x8xf32>, vector<8x8xf32>, vector<8x8xf32> -> vector<8x32xf32>
    %99 = arith.truncf %98 : vector<8x32xf32> to vector<8x32xbf16>
    %c0_37 = arith.constant 0 : index
    %c0_38 = arith.constant 0 : index
    %100 = vector.load %arg8[%c0_37, %c0_38] : memref<32x32xbf16, #tpu.memory_space<vmem>>, vector<32x32xbf16>
    %cst_39 = arith.constant dense<0.000000e+00> : vector<8x32xf32>
    %101 = tpu.matmul %99, %100, %cst_39 {dimension_numbers = #tpu.dot_dimension_numbers<[1], [0], [0], [1], [0, 0, 1, 1], [], []>} : vector<8x32xbf16>, vector<32x32xbf16>, vector<8x32xf32> -> vector<8x32xf32>
    %c0_40 = arith.constant 0 : index
    %c0_41 = arith.constant 0 : index
    %102 = vector.load %arg9[%c0_40, %c0_41] : memref<1x32xf32, #tpu.memory_space<vmem>>, vector<1x32xf32>
    %103 = vector.broadcast %102 : vector<1x32xf32> to vector<8x32xf32>
    %104 = arith.addf %101, %103 : vector<8x32xf32>
    %105 = arith.addf %1, %104 : vector<8x32xf32>
    %cst_42 = arith.constant dense<0.000000e+00> : vector<8xf32>
    %106 = vector.multi_reduction <add>, %105, %cst_42 [1] : vector<8x32xf32> to vector<8xf32>
    %107 = vector.shape_cast %106 : vector<8xf32> to vector<8x1xf32>
    %cst_43 = arith.constant 3.200000e+01 : f32
    %108 = vector.broadcast %cst_43 : f32 to vector<8x1xf32>
    %109 = arith.divf %107, %108 : vector<8x1xf32>
    %110 = vector.broadcast %109 : vector<8x1xf32> to vector<8x32xf32>
    %111 = arith.subf %105, %110 : vector<8x32xf32>
    %112 = arith.mulf %111, %111 : vector<8x32xf32>
    %cst_44 = arith.constant dense<0.000000e+00> : vector<8xf32>
    %113 = vector.multi_reduction <add>, %112, %cst_44 [1] : vector<8x32xf32> to vector<8xf32>
    %114 = vector.shape_cast %113 : vector<8xf32> to vector<8x1xf32>
    %cst_45 = arith.constant 3.200000e+01 : f32
    %115 = vector.broadcast %cst_45 : f32 to vector<8x1xf32>
    %116 = arith.divf %114, %115 : vector<8x1xf32>
    %117 = vector.broadcast %109 : vector<8x1xf32> to vector<8x32xf32>
    %118 = arith.subf %105, %117 : vector<8x32xf32>
    %cst_46 = arith.constant 9.99999974E-6 : f32
    %119 = vector.broadcast %cst_46 : f32 to vector<8x1xf32>
    %120 = arith.addf %116, %119 : vector<8x1xf32>
    %121 = math.rsqrt %120 : vector<8x1xf32>
    %122 = vector.broadcast %121 : vector<8x1xf32> to vector<8x32xf32>
    %123 = arith.mulf %118, %122 : vector<8x32xf32>
    %c0_47 = arith.constant 0 : index
    %c0_48 = arith.constant 0 : index
    %124 = vector.load %arg10[%c0_47, %c0_48] : memref<1x32xf32, #tpu.memory_space<vmem>>, vector<1x32xf32>
    %125 = vector.broadcast %124 : vector<1x32xf32> to vector<8x32xf32>
    %126 = arith.mulf %123, %125 : vector<8x32xf32>
    %c0_49 = arith.constant 0 : index
    %c0_50 = arith.constant 0 : index
    %127 = vector.load %arg11[%c0_49, %c0_50] : memref<1x32xf32, #tpu.memory_space<vmem>>, vector<1x32xf32>
    %128 = vector.broadcast %127 : vector<1x32xf32> to vector<8x32xf32>
    %129 = arith.addf %126, %128 : vector<8x32xf32>
    %c0_51 = arith.constant 0 : index
    %c0_52 = arith.constant 0 : index
    %c0_53 = arith.constant 0 : index
    %130 = vector.load %arg12[%c0_51, %c0_52, %c0_53] : memref<1x8x32xf32, #tpu.memory_space<vmem>>, vector<1x8x32xf32>
    %131 = vector.shape_cast %130 : vector<1x8x32xf32> to vector<8x32xf32>
    %132 = vector.shape_cast %129 : vector<8x32xf32> to vector<1x8x32xf32>
    tpu.vector_store %arg12[%c0_51, %c0_52, %c0_53], %132 {strides = array<i32>} : memref<1x8x32xf32, #tpu.memory_space<vmem>>, vector<1x8x32xf32>,
    return
  }
  func.func @transform_0(%arg0: i32) -> (i32, i32, i32) {
    %c0_i32 = arith.constant 0 : i32
    %c0_i32_0 = arith.constant 0 : i32
    %c0_i32_1 = arith.constant 0 : i32
    return %arg0, %c0_i32, %c0_i32_0 : i32, i32, i32
  }
  func.func @transform_1(%arg0: i32) -> (i32, i32, i32) {
    %c0_i32 = arith.constant 0 : i32
    %c0_i32_0 = arith.constant 0 : i32
    %c0_i32_1 = arith.constant 0 : i32
    return %arg0, %c0_i32, %c0_i32_0 : i32, i32, i32
  }
  func.func @transform_2(%arg0: i32) -> (i32, i32, i32) {
    %c0_i32 = arith.constant 0 : i32
    %c0_i32_0 = arith.constant 0 : i32
    %c0_i32_1 = arith.constant 0 : i32
    return %arg0, %c0_i32, %c0_i32_0 : i32, i32, i32
  }
  func.func @transform_3(%arg0: i32) -> (i32, i32) {
    %c0_i32 = arith.constant 0 : i32
    %c0_i32_0 = arith.constant 0 : i32
    %c0_i32_1 = arith.constant 0 : i32
    return %c0_i32, %c0_i32_0 : i32, i32
  }
  func.func @transform_4(%arg0: i32) -> (i32, i32) {
    %c0_i32 = arith.constant 0 : i32
    %c0_i32_0 = arith.constant 0 : i32
    %c0_i32_1 = arith.constant 0 : i32
    return %c0_i32, %c0_i32_0 : i32, i32
  }
  func.func @transform_5(%arg0: i32) -> (i32, i32) {
    %c0_i32 = arith.constant 0 : i32
    %c0_i32_0 = arith.constant 0 : i32
    %c0_i32_1 = arith.constant 0 : i32
    return %c0_i32, %c0_i32_0 : i32, i32
  }
  func.func @transform_6(%arg0: i32) -> (i32, i32) {
    %c0_i32 = arith.constant 0 : i32
    %c0_i32_0 = arith.constant 0 : i32
    %c0_i32_1 = arith.constant 0 : i32
    return %c0_i32, %c0_i32_0 : i32, i32
  }
  func.func @transform_7(%arg0: i32) -> (i32, i32) {
    %c0_i32 = arith.constant 0 : i32
    %c0_i32_0 = arith.constant 0 : i32
    %c0_i32_1 = arith.constant 0 : i32
    return %c0_i32, %c0_i32_0 : i32, i32
  }
  func.func @transform_8(%arg0: i32) -> (i32, i32) {
    %c0_i32 = arith.constant 0 : i32
    %c0_i32_0 = arith.constant 0 : i32
    %c0_i32_1 = arith.constant 0 : i32
    return %c0_i32, %c0_i32_0 : i32, i32
  }
  func.func @transform_9(%arg0: i32) -> (i32, i32) {
    %c0_i32 = arith.constant 0 : i32
    %c0_i32_0 = arith.constant 0 : i32
    %c0_i32_1 = arith.constant 0 : i32
    return %c0_i32, %c0_i32_0 : i32, i32
  }
  func.func @transform_10(%arg0: i32) -> (i32, i32) {
    %c0_i32 = arith.constant 0 : i32
    %c0_i32_0 = arith.constant 0 : i32
    %c0_i32_1 = arith.constant 0 : i32
    return %c0_i32, %c0_i32_0 : i32, i32
  }
  func.func @transform_11(%arg0: i32) -> (i32, i32, i32) {
    %c0_i32 = arith.constant 0 : i32
    %c0_i32_0 = arith.constant 0 : i32
    %c0_i32_1 = arith.constant 0 : i32
    return %arg0, %c0_i32, %c0_i32_0 : i32, i32, i32
  }
}

</mosaic_0001>

<llo_original>
// kernel: tpu_custom_call.1
$region0: #{tpu_custom_call.1}
  #allocation0 [shape = 'u32[]', space=smem, size = 0x4, offset = 0x4, fixed_abs, tag = 'smem constant byte address 0x4 - core index']
  #allocation1 [shape = 'u32[144,128]{1,0:T(1,128)}', space=vmem, size = 0x12000, scoped, tag = 'internal scratch']
  %s0 = inlined_call_operand.hbm [shape: f32[2,8,32], index: 0, kind: input, shape index: {}]
  %s1 = inlined_call_operand.hbm [shape: f32[2,8,32], index: 1, kind: input, shape index: {}]
  %s2 = inlined_call_operand.hbm [shape: f32[2,8,8], index: 2, kind: input, shape index: {}]
  %s3 = inlined_call_operand.hbm [shape: bf16[32,32], index: 3, kind: input, shape index: {}]
  %s4 = inlined_call_operand.vmem [shape: f32[1,32], index: 4, kind: input, shape index: {}]
  %s5 = inlined_call_operand.vmem [shape: bf16[32,64], index: 5, kind: input, shape index: {}]
  %s6 = inlined_call_operand.vmem [shape: f32[1,64], index: 6, kind: input, shape index: {}]
  %s7 = inlined_call_operand.hbm [shape: bf16[32,32], index: 7, kind: input, shape index: {}]
  %s8 = inlined_call_operand.vmem [shape: f32[1,32], index: 8, kind: input, shape index: {}]
  %s9 = inlined_call_operand.vmem [shape: f32[1,32], index: 9, kind: input, shape index: {}]
  %s10 = inlined_call_operand.vmem [shape: f32[1,32], index: 10, kind: input, shape index: {}]
  %s11 = inlined_call_operand.hbm [shape: f32[2,8,32], index: 11, kind: output, shape index: {}]
  %s12 = sld [smem:[#allocation0]]
  $region97: #{tpu_custom_call.1} parent=0
    _
  %s14 = ssub.s32 1, %s12
  %s15 = scalar_select 0, %s14, %s12
  $region1: #{tpu_custom_call.1} parent=0
    #allocation2 [shape = 'u8[8192]{0}', space=vmem, size = 0x2000, scoped, tag = 'input window, operand 0']
    #allocation3 [shape = 's32[2]{0}', space=sflag, size = 0x8, scoped, tag = 'scoped memory for tpu_custom_call.1']
    #allocation4 [shape = 's32[2]{0}', space=sflag, size = 0x8, scoped, tag = 'scoped memory for tpu_custom_call.1']
    #allocation5 [shape = 'u8[8192]{0}', space=vmem, size = 0x2000, scoped, tag = 'input window, operand 1']
    #allocation6 [shape = 's32[2]{0}', space=sflag, size = 0x8, scoped, tag = 'scoped memory for tpu_custom_call.1']
    #allocation7 [shape = 'u8[8192]{0}', space=vmem, size = 0x2000, scoped, tag = 'input window, operand 2']
    #allocation8 [shape = 'u8[8192]{0}', space=vmem, size = 0x2000, scoped, tag = 'input window, operand 3, single buffered']
    #allocation9 [shape = 's32[1]{0}', space=sflag, size = 0x4, scoped, tag = 'scoped memory for tpu_custom_call.1']
    #allocation10 [shape = 'u8[8192]{0}', space=vmem, size = 0x2000, scoped, tag = 'input window, operand 7, single buffered']
    #allocation11 [shape = 'u8[8192]{0}', space=vmem, size = 0x2000, scoped, tag = 'output window, operand 0']
    %16 = vsyncpa [#allocation3], 0
    %s17 = scalar_lea.sflag [#allocation3], 1
    %18 = vsyncpa %s17, 0
    %19 = vsyncpa [#allocation6], 0
    %s20 = scalar_lea.sflag [#allocation6], 1
    %21 = vsyncpa %s20, 0
    %22 = vsyncpa [#allocation9], 0
    %23 = vsyncpa [#allocation4], 0
    %s24 = scalar_lea.sflag [#allocation4], 1
    %25 = vsyncpa %s24, 0
    loop: start=0, step=1, limit=4
    $region2: #{tpu_custom_call.1} parent=1 // loop_pre_header
      _
    $region3: #{tpu_custom_call.1} parent=1 // loop_header
      %s27 = sphi 0, %s31
      %p28 = scmp.ge.s32.totalorder %s27, 4
      %s37 = sphi 0, %s39
      %s40 = sphi 0, %s37
      %s41 = sphi 0, %s40
      %s57 = sphi 0, %s41
      %s63 = sphi 0, %s65
      %s66 = sphi 0, %s63
      %s67 = sphi 0, %s66
      %s83 = sphi 0, %s67
      %s89 = sphi 0, %s91
      %s92 = sphi 0, %s89
      %s93 = sphi 0, %s92
      %s109 = sphi 0, %s93
      %s113 = sphi 0, %s113
      %s115 = sphi 0, %s113
      %s116 = sphi 0, %s115
      %s130 = sphi 0, %s116
      %s134 = sphi 0, %s134
      %s136 = sphi 0, %s134
      %s137 = sphi 0, %s136
      %s151 = sphi 0, %s137
      %s155 = sphi 0, %s155
      %s157 = sphi 0, %s155
      %s158 = sphi 0, %s157
      %s172 = sphi 0, %s158
      %s176 = sphi 0, %s176
      %s178 = sphi 0, %s176
      %s179 = sphi 0, %s178
      %s193 = sphi 0, %s179
      %s197 = sphi 0, %s197
      %s199 = sphi 0, %s197
      %s200 = sphi 0, %s199
      %s214 = sphi 0, %s200
      %s218 = sphi 0, %s218
      %s220 = sphi 0, %s218
      %s221 = sphi 0, %s220
      %s235 = sphi 0, %s221
      %s239 = sphi 0, %s239
      %s241 = sphi 0, %s239
      %s242 = sphi 0, %s241
      %s256 = sphi 0, %s242
      %s260 = sphi 0, %s260
      %s262 = sphi 0, %s260
      %s263 = sphi 0, %s262
      %s277 = sphi 0, %s263
      %s283 = sphi 0, %s285
      %s286 = sphi 0, %s283
      %s287 = sphi 0, %s286
      %s303 = sphi 0, %s287
    $region4: #{tpu_custom_call.1} parent=1 // loop_header_branch
      %30 = sbr.rel (%p28) target = $region8
    $region5: #{tpu_custom_call.1} parent=1 // loop_body
      %s32 = ssub.s32 %s27, 1
      %s33 = ssub.s32 %s27, 2
      %s34 = sadd.s32 %s27, 1
      %s35 = ssub.s32 %s27, %s34
      %p36 = scmp.eq.s32.totalorder %s35, 0
      %s38 = sadd.s32 %s37, 1
      %s39 = scalar_select %p36, %s37, %s38
      %p42 = pneg %p36
      %p43 = scmp.eq.s32.totalorder %s27, 1
      %p44 = por %p42, %p43
      %p45 = scmp.ne.s32.totalorder %s37, %s40
      %p46 = scmp.eq.s32.totalorder %s27, 0
      %p47 = por %p45, %p46
      %p48 = scmp.ne.s32.totalorder %s37, %s40
      %p49 = scmp.eq.s32.totalorder %s32, 1
      %p50 = por %p48, %p49
      %p51 = scmp.ne.s32.totalorder %s40, %s41
      %p52 = scmp.eq.s32.totalorder %s32, 0
      %p53 = por %p51, %p52
      %p54 = scmp.ne.s32.totalorder %s40, %s41
      %p55 = scmp.eq.s32.totalorder %s33, 1
      %p56 = por %p54, %p55
      %p58 = scmp.ne.s32.totalorder %s41, %s57
      %p59 = scmp.eq.s32.totalorder %s33, 0
      %p60 = por %p58, %p59
      %s61 = ssub.s32 %s27, %s34
      %p62 = scmp.eq.s32.totalorder %s61, 0
      %s64 = sadd.s32 %s63, 1
      %s65 = scalar_select %p62, %s63, %s64
      %p68 = pneg %p62
      %p69 = scmp.eq.s32.totalorder %s27, 1
      %p70 = por %p68, %p69
      %p71 = scmp.ne.s32.totalorder %s63, %s66
      %p72 = scmp.eq.s32.totalorder %s27, 0
      %p73 = por %p71, %p72
      %p74 = scmp.ne.s32.totalorder %s63, %s66
      %p75 = scmp.eq.s32.totalorder %s32, 1
      %p76 = por %p74, %p75
      %p77 = scmp.ne.s32.totalorder %s66, %s67
      %p78 = scmp.eq.s32.totalorder %s32, 0
      %p79 = por %p77, %p78
      %p80 = scmp.ne.s32.totalorder %s66, %s67
      %p81 = scmp.eq.s32.totalorder %s33, 1
      %p82 = por %p80, %p81
      %p84 = scmp.ne.s32.totalorder %s67, %s83
      %p85 = scmp.eq.s32.totalorder %s33, 0
      %p86 = por %p84, %p85
      %s87 = ssub.s32 %s27, %s34
      %p88 = scmp.eq.s32.totalorder %s87, 0
      %s90 = sadd.s32 %s89, 1
      %s91 = scalar_select %p88, %s89, %s90
      %p94 = pneg %p88
      %p95 = scmp.eq.s32.totalorder %s27, 1
      %p96 = por %p94, %p95
      %p97 = scmp.ne.s32.totalorder %s89, %s92
      %p98 = scmp.eq.s32.totalorder %s27, 0
      %p99 = por %p97, %p98
      %p100 = scmp.ne.s32.totalorder %s89, %s92
      %p101 = scmp.eq.s32.totalorder %s32, 1
      %p102 = por %p100, %p101
      %p103 = scmp.ne.s32.totalorder %s92, %s93
      %p104 = scmp.eq.s32.totalorder %s32, 0
      %p105 = por %p103, %p104
      %p106 = scmp.ne.s32.totalorder %s92, %s93
      %p107 = scmp.eq.s32.totalorder %s33, 1
      %p108 = por %p106, %p107
      %p110 = scmp.ne.s32.totalorder %s93, %s109
      %p111 = scmp.eq.s32.totalorder %s33, 0
      %p112 = por %p110, %p111
      %s114 = sadd.s32 %s113, 1
      %p117 = scmp.eq.s32.totalorder %s27, 1
      %p118 = scmp.ne.s32.totalorder %s113, %s115
      %p119 = scmp.eq.s32.totalorder %s27, 0
      %p120 = por %p118, %p119
      %p121 = scmp.ne.s32.totalorder %s113, %s115
      %p122 = scmp.eq.s32.totalorder %s32, 1
      %p123 = por %p121, %p122
      %p124 = scmp.ne.s32.totalorder %s115, %s116
      %p125 = scmp.eq.s32.totalorder %s32, 0
      %p126 = por %p124, %p125
      %p127 = scmp.ne.s32.totalorder %s115, %s116
      %p128 = scmp.eq.s32.totalorder %s33, 1
      %p129 = por %p127, %p128
      %p131 = scmp.ne.s32.totalorder %s116, %s130
      %p132 = scmp.eq.s32.totalorder %s33, 0
      %p133 = por %p131, %p132
      %s135 = sadd.s32 %s134, 1
      %p138 = scmp.eq.s32.totalorder %s27, 1
      %p139 = scmp.ne.s32.totalorder %s134, %s136
      %p140 = scmp.eq.s32.totalorder %s27, 0
      %p141 = por %p139, %p140
      %p142 = scmp.ne.s32.totalorder %s134, %s136
      %p143 = scmp.eq.s32.totalorder %s32, 1
      %p144 = por %p142, %p143
      %p145 = scmp.ne.s32.totalorder %s136, %s137
      %p146 = scmp.eq.s32.totalorder %s32, 0
      %p147 = por %p145, %p146
      %p148 = scmp.ne.s32.totalorder %s136, %s137
      %p149 = scmp.eq.s32.totalorder %s33, 1
      %p150 = por %p148, %p149
      %p152 = scmp.ne.s32.totalorder %s137, %s151
      %p153 = scmp.eq.s32.totalorder %s33, 0
      %p154 = por %p152, %p153
      %s156 = sadd.s32 %s155, 1
      %p159 = scmp.eq.s32.totalorder %s27, 1
      %p160 = scmp.ne.s32.totalorder %s155, %s157
      %p161 = scmp.eq.s32.totalorder %s27, 0
      %p162 = por %p160, %p161
      %p163 = scmp.ne.s32.totalorder %s155, %s157
      %p164 = scmp.eq.s32.totalorder %s32, 1
      %p165 = por %p163, %p164
      %p166 = scmp.ne.s32.totalorder %s157, %s158
      %p167 = scmp.eq.s32.totalorder %s32, 0
      %p168 = por %p166, %p167
      %p169 = scmp.ne.s32.totalorder %s157, %s158
      %p170 = scmp.eq.s32.totalorder %s33, 1
      %p171 = por %p169, %p170
      %p173 = scmp.ne.s32.totalorder %s158, %s172
      %p174 = scmp.eq.s32.totalorder %s33, 0
      %p175 = por %p173, %p174
      %s177 = sadd.s32 %s176, 1
      %p180 = scmp.eq.s32.totalorder %s27, 1
      %p181 = scmp.ne.s32.totalorder %s176, %s178
      %p182 = scmp.eq.s32.totalorder %s27, 0
      %p183 = por %p181, %p182
      %p184 = scmp.ne.s32.totalorder %s176, %s178
      %p185 = scmp.eq.s32.totalorder %s32, 1
      %p186 = por %p184, %p185
      %p187 = scmp.ne.s32.totalorder %s178, %s179
      %p188 = scmp.eq.s32.totalorder %s32, 0
      %p189 = por %p187, %p188
      %p190 = scmp.ne.s32.totalorder %s178, %s179
      %p191 = scmp.eq.s32.totalorder %s33, 1
      %p192 = por %p190, %p191
      %p194 = scmp.ne.s32.totalorder %s179, %s193
      %p195 = scmp.eq.s32.totalorder %s33, 0
      %p196 = por %p194, %p195
      %s198 = sadd.s32 %s197, 1
      %p201 = scmp.eq.s32.totalorder %s27, 1
      %p202 = scmp.ne.s32.totalorder %s197, %s199
      %p203 = scmp.eq.s32.totalorder %s27, 0
      %p204 = por %p202, %p203
      %p205 = scmp.ne.s32.totalorder %s197, %s199
      %p206 = scmp.eq.s32.totalorder %s32, 1
      %p207 = por %p205, %p206
      %p208 = scmp.ne.s32.totalorder %s199, %s200
      %p209 = scmp.eq.s32.totalorder %s32, 0
      %p210 = por %p208, %p209
      %p211 = scmp.ne.s32.totalorder %s199, %s200
      %p212 = scmp.eq.s32.totalorder %s33, 1
      %p213 = por %p211, %p212
      %p215 = scmp.ne.s32.totalorder %s200, %s214
      %p216 = scmp.eq.s32.totalorder %s33, 0
      %p217 = por %p215, %p216
      %s219 = sadd.s32 %s218, 1
      %p222 = scmp.eq.s32.totalorder %s27, 1
      %p223 = scmp.ne.s32.totalorder %s218, %s220
      %p224 = scmp.eq.s32.totalorder %s27, 0
      %p225 = por %p223, %p224
      %p226 = scmp.ne.s32.totalorder %s218, %s220
      %p227 = scmp.eq.s32.totalorder %s32, 1
      %p228 = por %p226, %p227
      %p229 = scmp.ne.s32.totalorder %s220, %s221
      %p230 = scmp.eq.s32.totalorder %s32, 0
      %p231 = por %p229, %p230
      %p232 = scmp.ne.s32.totalorder %s220, %s221
      %p233 = scmp.eq.s32.totalorder %s33, 1
      %p234 = por %p232, %p233
      %p236 = scmp.ne.s32.totalorder %s221, %s235
      %p237 = scmp.eq.s32.totalorder %s33, 0
      %p238 = por %p236, %p237
      %s240 = sadd.s32 %s239, 1
      %p243 = scmp.eq.s32.totalorder %s27, 1
      %p244 = scmp.ne.s32.totalorder %s239, %s241
      %p245 = scmp.eq.s32.totalorder %s27, 0
      %p246 = por %p244, %p245
      %p247 = scmp.ne.s32.totalorder %s239, %s241
      %p248 = scmp.eq.s32.totalorder %s32, 1
      %p249 = por %p247, %p248
      %p250 = scmp.ne.s32.totalorder %s241, %s242
      %p251 = scmp.eq.s32.totalorder %s32, 0
      %p252 = por %p250, %p251
      %p253 = scmp.ne.s32.totalorder %s241, %s242
      %p254 = scmp.eq.s32.totalorder %s33, 1
      %p255 = por %p253, %p254
      %p257 = scmp.ne.s32.totalorder %s242, %s256
      %p258 = scmp.eq.s32.totalorder %s33, 0
      %p259 = por %p257, %p258
      %s261 = sadd.s32 %s260, 1
      %p264 = scmp.eq.s32.totalorder %s27, 1
      %p265 = scmp.ne.s32.totalorder %s260, %s262
      %p266 = scmp.eq.s32.totalorder %s27, 0
      %p267 = por %p265, %p266
      %p268 = scmp.ne.s32.totalorder %s260, %s262
      %p269 = scmp.eq.s32.totalorder %s32, 1
      %p270 = por %p268, %p269
      %p271 = scmp.ne.s32.totalorder %s262, %s263
      %p272 = scmp.eq.s32.totalorder %s32, 0
      %p273 = por %p271, %p272
      %p274 = scmp.ne.s32.totalorder %s262, %s263
      %p275 = scmp.eq.s32.totalorder %s33, 1
      %p276 = por %p274, %p275
      %p278 = scmp.ne.s32.totalorder %s263, %s277
      %p279 = scmp.eq.s32.totalorder %s33, 0
      %p280 = por %p278, %p279
      %s281 = ssub.s32 %s27, %s34
      %p282 = scmp.eq.s32.totalorder %s281, 0
      %s284 = sadd.s32 %s283, 1
      %s285 = scalar_select %p282, %s283, %s284
      %p288 = pneg %p282
      %p289 = scmp.eq.s32.totalorder %s27, 1
      %p290 = por %p288, %p289
      %p291 = scmp.ne.s32.totalorder %s283, %s286
      %p292 = scmp.eq.s32.totalorder %s27, 0
      %p293 = por %p291, %p292
      %p294 = scmp.ne.s32.totalorder %s283, %s286
      %p295 = scmp.eq.s32.totalorder %s32, 1
      %p296 = por %p294, %p295
      %p297 = scmp.ne.s32.totalorder %s286, %s287
      %p298 = scmp.eq.s32.totalorder %s32, 0
      %p299 = por %p297, %p298
      %p300 = scmp.ne.s32.totalorder %s286, %s287
      %p301 = scmp.eq.s32.totalorder %s33, 1
      %p302 = por %p300, %p301
      %p304 = scmp.ne.s32.totalorder %s287, %s303
      %p305 = scmp.eq.s32.totalorder %s33, 0
      %p306 = por %p304, %p305
      %p307 = scmp.le.s32.totalorder 1, %s27
      %p308 = scmp.lt.s32.totalorder %s27, 3
      %p309 = pnand %p307, %p308
      %p310 = pneg %p309
      // Predicated region
      $region9: #{tpu_custom_call.1} parent=5 // pred_check
        _
      $region10: #{tpu_custom_call.1} parent=5 // pred_check_branch
        %312 = sbr.rel (%p309) target = $region12
      $region11: #{tpu_custom_call.1} parent=5 // pred_region
        %s313 = ssub.s32 %s27, 1
        // Predicated region
        $region13: #{tpu_custom_call.1} parent=11 // pred_check
          %p314 = pneg %p126
        $region14: #{tpu_custom_call.1} parent=11 // pred_check_branch
          %316 = sbr.rel (%p314) target = $region16
        $region15: #{tpu_custom_call.1} parent=11 // pred_region
          %s318 = ssub.s32 256, 256
          %319 = vsyncadd [#allocation9], %s318
          %s320 = sshll.u32 [#allocation8], 4
          %s321 = int_to_ptr.vmem [resolvable:$true] %s320
          %326 = dma.hbm_to_vmem [thread:$0]  %s3, 256, %s321, [#allocation9], 64, 64, 4
        $region16: #{tpu_custom_call.1} parent=11 // pred_fallthru
          _
        // Predicated region
        $region17: #{tpu_custom_call.1} parent=11 // pred_check
          %p327 = pneg %p147
        $region18: #{tpu_custom_call.1} parent=11 // pred_check_branch
          %329 = sbr.rel (%p327) target = $region20
        $region19: #{tpu_custom_call.1} parent=11 // pred_region
          _
        $region20: #{tpu_custom_call.1} parent=11 // pred_fallthru
          _
        // Predicated region
        $region21: #{tpu_custom_call.1} parent=11 // pred_check
          %p330 = pneg %p168
        $region22: #{tpu_custom_call.1} parent=11 // pred_check_branch
          %332 = sbr.rel (%p330) target = $region24
        $region23: #{tpu_custom_call.1} parent=11 // pred_region
          _
        $region24: #{tpu_custom_call.1} parent=11 // pred_fallthru
          _
        // Predicated region
        $region25: #{tpu_custom_call.1} parent=11 // pred_check
          %p333 = pneg %p189
        $region26: #{tpu_custom_call.1} parent=11 // pred_check_branch
          %335 = sbr.rel (%p333) target = $region28
        $region27: #{tpu_custom_call.1} parent=11 // pred_region
          _
        $region28: #{tpu_custom_call.1} parent=11 // pred_fallthru
          _
        // Predicated region
        $region29: #{tpu_custom_call.1} parent=11 // pred_check
          %p336 = pneg %p210
        $region30: #{tpu_custom_call.1} parent=11 // pred_check_branch
          %338 = sbr.rel (%p336) target = $region32
        $region31: #{tpu_custom_call.1} parent=11 // pred_region
          %s340 = ssub.s32 256, 256
          %341 = vsyncadd [#allocation9], %s340
          %s342 = sshll.u32 [#allocation10], 4
          %s343 = int_to_ptr.vmem [resolvable:$true] %s342
          %348 = dma.hbm_to_vmem [thread:$0]  %s7, 256, %s343, [#allocation9], 64, 64, 4
        $region32: #{tpu_custom_call.1} parent=11 // pred_fallthru
          _
        // Predicated region
        $region33: #{tpu_custom_call.1} parent=11 // pred_check
          %p349 = pneg %p231
        $region34: #{tpu_custom_call.1} parent=11 // pred_check_branch
          %351 = sbr.rel (%p349) target = $region36
        $region35: #{tpu_custom_call.1} parent=11 // pred_region
          _
        $region36: #{tpu_custom_call.1} parent=11 // pred_fallthru
          _
        // Predicated region
        $region37: #{tpu_custom_call.1} parent=11 // pred_check
          %p352 = pneg %p252
        $region38: #{tpu_custom_call.1} parent=11 // pred_check_branch
          %354 = sbr.rel (%p352) target = $region40
        $region39: #{tpu_custom_call.1} parent=11 // pred_region
          _
        $region40: #{tpu_custom_call.1} parent=11 // pred_fallthru
          _
        // Predicated region
        $region41: #{tpu_custom_call.1} parent=11 // pred_check
          %p355 = pneg %p273
        $region42: #{tpu_custom_call.1} parent=11 // pred_check_branch
          %357 = sbr.rel (%p355) target = $region44
        $region43: #{tpu_custom_call.1} parent=11 // pred_region
          _
        $region44: #{tpu_custom_call.1} parent=11 // pred_fallthru
          _
      $region12: #{tpu_custom_call.1} parent=5 // pred_fallthru
        _
      %p358 = scmp.lt.s32.totalorder %s27, 2
      // Predicated region
      $region45: #{tpu_custom_call.1} parent=5 // pred_check
        %p359 = pneg %p358
      $region46: #{tpu_custom_call.1} parent=5 // pred_check_branch
        %361 = sbr.rel (%p359) target = $region48
      $region47: #{tpu_custom_call.1} parent=5 // pred_region
        // Predicated region
        $region49: #{tpu_custom_call.1} parent=47 // pred_check
          %p362 = pneg %p47
        $region50: #{tpu_custom_call.1} parent=47 // pred_check_branch
          %364 = sbr.rel (%p362) target = $region52
        $region51: #{tpu_custom_call.1} parent=47 // pred_region
          %s365 = sand.u32 %s37, 1
          %s366 = scalar_lea.sflag [#allocation3], %s365
          %s367 = sand.u32 %s37, 1
          %s368 = smul.addr %s367, 8
          %s369 = scalar_lea.vmem [#allocation2], %s368
          %s371 = ssub.s32 128, 128
          %372 = vsyncadd %s366, %s371
          %s373 = smul.addr %s27, 128
          %s374 = scalar_lea.hbm %s0, %s373
          %s376 = sshll.u32 %s369, 4
          %s377 = int_to_ptr.vmem [resolvable:$true] %s376
          %379 = dma.hbm_to_vmem [thread:$0]  %s374, 128, %s377, %s366
        $region52: #{tpu_custom_call.1} parent=47 // pred_fallthru
          _
        // Predicated region
        $region53: #{tpu_custom_call.1} parent=47 // pred_check
          %p380 = pneg %p73
        $region54: #{tpu_custom_call.1} parent=47 // pred_check_branch
          %382 = sbr.rel (%p380) target = $region56
        $region55: #{tpu_custom_call.1} parent=47 // pred_region
          %s383 = sand.u32 %s27, 1
          %s384 = scalar_lea.sflag [#allocation6], %s383
          %s385 = sand.u32 %s63, 1
          %s386 = smul.addr %s385, 8
          %s387 = scalar_lea.vmem [#allocation5], %s386
          %s389 = ssub.s32 128, 128
          %390 = vsyncadd %s384, %s389
          %s391 = smul.addr %s27, 128
          %s392 = scalar_lea.hbm %s1, %s391
          %s394 = sshll.u32 %s387, 4
          %s395 = int_to_ptr.vmem [resolvable:$true] %s394
          %397 = dma.hbm_to_vmem [thread:$0]  %s392, 128, %s395, %s384
        $region56: #{tpu_custom_call.1} parent=47 // pred_fallthru
          _
        // Predicated region
        $region57: #{tpu_custom_call.1} parent=47 // pred_check
          %p398 = pneg %p99
        $region58: #{tpu_custom_call.1} parent=47 // pred_check_branch
          %400 = sbr.rel (%p398) target = $region60
        $region59: #{tpu_custom_call.1} parent=47 // pred_region
          %s401 = sand.u32 %s27, 1
          %s402 = scalar_lea.sflag [#allocation6], %s401
          %s403 = sand.u32 %s89, 1
          %s404 = smul.addr %s403, 8
          %s405 = scalar_lea.vmem [#allocation7], %s404
          %s407 = ssub.s32 128, 128
          %408 = vsyncadd %s402, %s407
          %s409 = smul.addr %s27, 128
          %s410 = scalar_lea.hbm %s2, %s409
          %s412 = sshll.u32 %s405, 4
          %s413 = int_to_ptr.vmem [resolvable:$true] %s412
          %415 = dma.hbm_to_vmem [thread:$0]  %s410, 128, %s413, %s402
        $region60: #{tpu_custom_call.1} parent=47 // pred_fallthru
          _
      $region48: #{tpu_custom_call.1} parent=5 // pred_fallthru
        _
      %p416 = scmp.le.s32.totalorder 1, %s27
      %p417 = scmp.lt.s32.totalorder %s27, 3
      %p418 = pnand %p416, %p417
      %p419 = pneg %p418
      // Predicated region
      $region61: #{tpu_custom_call.1} parent=5 // pred_check
        _
      $region62: #{tpu_custom_call.1} parent=5 // pred_check_branch
        %421 = sbr.rel (%p418) target = $region64
      $region63: #{tpu_custom_call.1} parent=5 // pred_region
        %s422 = ssub.s32 %s27, 1
        %s423 = sand.u32 %s40, 1
        %s424 = scalar_lea.sflag [#allocation3], %s423
        %s425 = sand.u32 %s40, 1
        %s426 = smul.addr %s425, 8
        %s427 = scalar_lea.vmem [#allocation2], %s426
        // Predicated region
        $region65: #{tpu_custom_call.1} parent=63 // pred_check
          %p428 = pneg %p53
        $region66: #{tpu_custom_call.1} parent=63 // pred_check_branch
          %430 = sbr.rel (%p428) target = $region68
        $region67: #{tpu_custom_call.1} parent=63 // pred_region
          %431 = dma.done %s424, 128
        $region68: #{tpu_custom_call.1} parent=63 // pred_fallthru
          _
        %s432 = sand.u32 %s32, 1
        %s433 = scalar_lea.sflag [#allocation6], %s432
        %s434 = sand.u32 %s66, 1
        %s435 = smul.addr %s434, 8
        %s436 = scalar_lea.vmem [#allocation5], %s435
        // Predicated region
        $region69: #{tpu_custom_call.1} parent=63 // pred_check
          %p437 = pneg %p79
        $region70: #{tpu_custom_call.1} parent=63 // pred_check_branch
          %439 = sbr.rel (%p437) target = $region72
        $region71: #{tpu_custom_call.1} parent=63 // pred_region
          %440 = dma.done %s433, 128
        $region72: #{tpu_custom_call.1} parent=63 // pred_fallthru
          _
        %s441 = sand.u32 %s32, 1
        %s442 = scalar_lea.sflag [#allocation6], %s441
        %s443 = sand.u32 %s92, 1
        %s444 = smul.addr %s443, 8
        %s445 = scalar_lea.vmem [#allocation7], %s444
        // Predicated region
        $region73: #{tpu_custom_call.1} parent=63 // pred_check
          %p446 = pneg %p105
        $region74: #{tpu_custom_call.1} parent=63 // pred_check_branch
          %448 = sbr.rel (%p446) target = $region76
        $region75: #{tpu_custom_call.1} parent=63 // pred_region
          %449 = dma.done %s442, 128
        $region76: #{tpu_custom_call.1} parent=63 // pred_fallthru
          _
        // Predicated region
        $region77: #{tpu_custom_call.1} parent=63 // pred_check
          %p450 = pneg %p126
        $region78: #{tpu_custom_call.1} parent=63 // pred_check_branch
          %452 = sbr.rel (%p450) target = $region80
        $region79: #{tpu_custom_call.1} parent=63 // pred_region
          %453 = dma.done [#allocation9], 256
        $region80: #{tpu_custom_call.1} parent=63 // pred_fallthru
          _
        // Predicated region
        $region81: #{tpu_custom_call.1} parent=63 // pred_check
          %p454 = pneg %p210
        $region82: #{tpu_custom_call.1} parent=63 // pred_check_branch
          %456 = sbr.rel (%p454) target = $region84
        $region83: #{tpu_custom_call.1} parent=63 // pred_region
          %457 = dma.done [#allocation9], 256
        $region84: #{tpu_custom_call.1} parent=63 // pred_fallthru
          _
        %s458 = sand.u32 %s40, 1
        %s459 = scalar_lea.sflag [#allocation3], %s458
        %s460 = sand.u32 %s40, 1
        %s461 = smul.addr %s460, 8
        %s462 = scalar_lea.vmem [#allocation2], %s461
        %p463 = pneg %p53
        %p464 = pneg %p50
        %s465 = sand.u32 %s32, 1
        %s466 = scalar_lea.sflag [#allocation6], %s465
        %s467 = sand.u32 %s66, 1
        %s468 = smul.addr %s467, 8
        %s469 = scalar_lea.vmem [#allocation5], %s468
        %p470 = pneg %p79
        %p471 = pneg %p76
        %s472 = sand.u32 %s32, 1
        %s473 = scalar_lea.sflag [#allocation6], %s472
        %s474 = sand.u32 %s92, 1
        %s475 = smul.addr %s474, 8
        %s476 = scalar_lea.vmem [#allocation7], %s475
        %p477 = pneg %p105
        %p478 = pneg %p102
        %p479 = pneg %p126
        %p480 = pneg %p123
        %p481 = pneg %p147
        %p482 = pneg %p144
        %p483 = pneg %p168
        %p484 = pneg %p165
        %p485 = pneg %p189
        %p486 = pneg %p186
        %p487 = pneg %p210
        %p488 = pneg %p207
        %p489 = pneg %p231
        %p490 = pneg %p228
        %p491 = pneg %p252
        %p492 = pneg %p249
        %p493 = pneg %p273
        %p494 = pneg %p270
        %p495 = pneg %p299
        %p496 = pneg %p296
        %s497 = sand.u32 %s286, 1
        %s498 = scalar_lea.sflag [#allocation4], %s497
        %s499 = sand.u32 %s286, 1
        %s500 = smul.addr %s499, 8
        %s501 = scalar_lea.vmem [#allocation11], %s500
        %v503 = vld [vmem:[%s427] sm:$0xff]
        %v504 = vld [vmem:[%s436] sm:$0xff]
        %v505 = vld [vmem:[%s445] sm:$0xff]
        %v506 = vpack.c.bf16 %v503, %v503
        %v507 = vld [vmem:[#allocation8] sm:$0xf]
        %v508 = vld [vmem:[#allocation8 + $0x4] sm:$0xf]
        %v509 = vld [vmem:[#allocation8 + $0x8] sm:$0xf]
        %v510 = vld [vmem:[#allocation8 + $0xc] sm:$0xf]
        %v511 = vld [vmem:[%s4] sm:$0x1]
        %v513 = vlaneseq
        %v514 = vshrl.u32 %v513, 7
        %v515 = vsub.s32 0, %v514
        %v516 = vrot.slane %v511, %v515
        %v522 = vunpack.c.l.b16 %v507
        %v523 = vunpack.c.l.b16 %v508
        %v524 = vunpack.c.l.b16 %v509
        %v525 = vunpack.c.l.b16 %v510
        %v526 = vpack.c.b16 %v523, %v522
        %v527 = vpack.c.b16 %v525, %v524
        %vm530 = vcmask 261120
        %v532 = vsel %vm530, %v506, 0
        %534 = vmatprep.subr.bf16.mxu0 0
        %535 = vmatpush1.bf16.msra.mxu0 %v526
        %536 = vmatprep.subr.bf16.mxu0 0
        %537 = vmatpush1.bf16.msra.mxu0 %v527
        %538 = vmatprep.subr.bf16.mxu0 0
        %539 = vmatpush1.bf16.msra.mxu0 0
        %540 = vmatprep.subr.bf16.mxu0 0
        %541 = vmatpush1.bf16.msra.mxu0 0
        %542 = vmatprep.subr.bf16.mxu0 0
        %543 = vmatpush1.bf16.msra.mxu0 0
        %544 = vmatprep.subr.bf16.mxu0 0
        %545 = vmatpush1.bf16.msra.mxu0 0
        %546 = vmatprep.subr.bf16.mxu0 0
        %547 = vmatpush1.bf16.msra.mxu0 0
        %548 = vmatprep.subr.bf16.mxu0 0
        %549 = vmatpush1.bf16.msra.mxu0 0
        %550 = vmatprep.subr.bf16.mxu0 0
        %551 = vmatpush1.bf16.msra.mxu0 0
        %552 = vmatprep.subr.bf16.mxu0 0
        %553 = vmatpush1.bf16.msra.mxu0 0
        %554 = vmatprep.subr.bf16.mxu0 0
        %555 = vmatpush1.bf16.msra.mxu0 0
        %556 = vmatprep.subr.bf16.mxu0 0
        %557 = vmatpush1.bf16.msra.mxu0 0
        %558 = vmatprep.subr.bf16.mxu0 0
        %559 = vmatpush1.bf16.msra.mxu0 0
        %560 = vmatprep.subr.bf16.mxu0 0
        %561 = vmatpush1.bf16.msra.mxu0 0
        %562 = vmatprep.subr.bf16.mxu0 0
        %563 = vmatpush1.bf16.msra.mxu0 0
        %564 = vmatprep.subr.bf16.mxu0 0
        %565 = vmatpush1.bf16.msra.mxu0 0
        %566 = vmatprep.mubr.bf16.mxu0 0
        %567 = vmatmul.mubr.bf16.gmra.mrb[0].mxu0 %v532
        %v568 = vpop.f32.mrb[0].mxu0
        %v569 = vadd.f32 %v516, %v568
        %v570 = vpop.f32.mrb[0].mxu0
        %v571 = vpop.f32.mrb[0].mxu0
        %v572 = vpop.f32.mrb[0].mxu0
        %573 = vdwg.mxu0
        %v574 = vpack.c.bf16 %v504, %v504
        %v575 = vld [vmem:[%s5] sm:$0xf]
        %v576 = vld [vmem:[%s5 + $0x4] sm:$0xf]
        %v577 = vld [vmem:[%s5 + $0x8] sm:$0xf]
        %v578 = vld [vmem:[%s5 + $0xc] sm:$0xf]
        %v579 = vld [vmem:[%s6] sm:$0x1]
        %v581 = vlaneseq
        %v582 = vshrl.u32 %v581, 7
        %v583 = vsub.s32 0, %v582
        %v584 = vrot.slane %v579, %v583
        %v590 = vunpack.c.l.b16 %v575
        %v591 = vunpack.c.l.b16 %v576
        %v592 = vunpack.c.l.b16 %v577
        %v593 = vunpack.c.l.b16 %v578
        %v594 = vpack.c.b16 %v591, %v590
        %v595 = vpack.c.b16 %v593, %v592
        %v599 = vsel %vm530, %v574, 0
        %601 = vmatprep.subr.bf16.mxu0 0
        %602 = vmatpush1.bf16.msra.mxu0 %v594
        %603 = vmatprep.subr.bf16.mxu0 0
        %604 = vmatpush1.bf16.msra.mxu0 %v595
        %605 = vmatprep.subr.bf16.mxu0 0
        %606 = vmatpush1.bf16.msra.mxu0 0
        %607 = vmatprep.subr.bf16.mxu0 0
        %608 = vmatpush1.bf16.msra.mxu0 0
        %609 = vmatprep.subr.bf16.mxu0 0
        %610 = vmatpush1.bf16.msra.mxu0 0
        %611 = vmatprep.subr.bf16.mxu0 0
        %612 = vmatpush1.bf16.msra.mxu0 0
        %613 = vmatprep.subr.bf16.mxu0 0
        %614 = vmatpush1.bf16.msra.mxu0 0
        %615 = vmatprep.subr.bf16.mxu0 0
        %616 = vmatpush1.bf16.msra.mxu0 0
        %617 = vmatprep.subr.bf16.mxu0 0
        %618 = vmatpush1.bf16.msra.mxu0 0
        %619 = vmatprep.subr.bf16.mxu0 0
        %620 = vmatpush1.bf16.msra.mxu0 0
        %621 = vmatprep.subr.bf16.mxu0 0
        %622 = vmatpush1.bf16.msra.mxu0 0
        %623 = vmatprep.subr.bf16.mxu0 0
        %624 = vmatpush1.bf16.msra.mxu0 0
        %625 = vmatprep.subr.bf16.mxu0 0
        %626 = vmatpush1.bf16.msra.mxu0 0
        %627 = vmatprep.subr.bf16.mxu0 0
        %628 = vmatpush1.bf16.msra.mxu0 0
        %629 = vmatprep.subr.bf16.mxu0 0
        %630 = vmatpush1.bf16.msra.mxu0 0
        %631 = vmatprep.subr.bf16.mxu0 0
        %632 = vmatpush1.bf16.msra.mxu0 0
        %633 = vmatprep.mubr.bf16.mxu0 0
        %634 = vmatmul.mubr.bf16.gmra.mrb[0].mxu0 %v599
        %v635 = vpop.f32.mrb[0].mxu0
        %v636 = vadd.f32 %v584, %v635
        %v637 = vpop.f32.mrb[0].mxu0
        %v638 = vpop.f32.mrb[0].mxu0
        %v639 = vpop.f32.mrb[0].mxu0
        %640 = vdwg.mxu0
        %v641 = vmul.f32 %v569, 0.35355338
        %v642 = vpack.c.bf16 %v641, %v641
        %v643 = vpack.c.bf16 %v636, %v636
        %vm644 = vcmp.eq.f32.partialorder %v505, 0.0
        %v645 = vsel %vm644, -1e+09, 0.0
        %vm646 = vcmask 64512
        %v648 = vsel %vm646, %v642, 0
        %v651 = vsel %vm646, %v643, 0
        %653 = vmatprep.subr.bf16.mxu0 0
        %654 = vmatpush1.bf16.xpose.msra.mxu0 %v651
        %655 = vmatprep.subr.bf16.mxu0 0
        %656 = vmatpush1.bf16.xpose.msra.mxu0 0
        %657 = vmatprep.subr.bf16.mxu0 0
        %658 = vmatpush1.bf16.xpose.msra.mxu0 0
        %659 = vmatprep.subr.bf16.mxu0 0
        %660 = vmatpush1.bf16.xpose.msra.mxu0 0
        %661 = vmatprep.subr.bf16.mxu0 0
        %662 = vmatpush1.bf16.xpose.msra.mxu0 0
        %663 = vmatprep.subr.bf16.mxu0 0
        %664 = vmatpush1.bf16.xpose.msra.mxu0 0
        %665 = vmatprep.subr.bf16.mxu0 0
        %666 = vmatpush1.bf16.xpose.msra.mxu0 0
        %667 = vmatprep.subr.bf16.mxu0 0
        %668 = vmatpush1.bf16.xpose.msra.mxu0 0
        %669 = vmatprep.subr.bf16.mxu0 0
        %670 = vmatpush1.bf16.xpose.msra.mxu0 0
        %671 = vmatprep.subr.bf16.mxu0 0
        %672 = vmatpush1.bf16.xpose.msra.mxu0 0
        %673 = vmatprep.subr.bf16.mxu0 0
        %674 = vmatpush1.bf16.xpose.msra.mxu0 0
        %675 = vmatprep.subr.bf16.mxu0 0
        %676 = vmatpush1.bf16.xpose.msra.mxu0 0
        %677 = vmatprep.subr.bf16.mxu0 0
        %678 = vmatpush1.bf16.xpose.msra.mxu0 0
        %679 = vmatprep.subr.bf16.mxu0 0
        %680 = vmatpush1.bf16.xpose.msra.mxu0 0
        %681 = vmatprep.subr.bf16.mxu0 0
        %682 = vmatpush1.bf16.xpose.msra.mxu0 0
        %683 = vmatprep.subr.bf16.mxu0 0
        %684 = vmatpush1.bf16.xpose.msra.mxu0 0
        %685 = vmatprep.mubr.bf16.mxu0 0
        %686 = vmatmul.mubr.bf16.gmra.mrb[0].mxu0 %v648
        %v687 = vpop.f32.mrb[0].mxu0
        %v688 = vadd.f32 %v645, %v687
        %v689 = vpop.f32.mrb[0].mxu0
        %v690 = vpop.f32.mrb[0].mxu0
        %v691 = vpop.f32.mrb[0].mxu0
        %692 = vdwg.mxu0
        %v693 = vsel %vm646, %v688, -inf
        %694 = vmax.xlane.f32.xlu0 %v693
        %v695 = vpop.xlane.xlu0 %694
        %v696 = vsub.f32 %v688, %v695
        %v697 = vmul.f32 %v696, 1.442695
        %v698 = vpow.pop %v697
        %v699 = vsel %vm646, %v698, 0.0
        %700 = vadd.xlane.f32.xlu0 %v699
        %v701 = vpop.xlane.xlu0 %700
        %v702 = vrcp.pop %v701
        %v703 = vmul.f32 %v698, %v702
        %v704 = vpack.c.bf16 %v703, %v703
        %706 = vrot.lane.b32.xlu0 %v643, 96
        %v707 = vpop.permute.xlu0 %706
        %v709 = vsel %vm646, %v704, 0
        %vm711 = vcmask 1043456
        %v713 = vsel %vm711, %v707, 0
        %715 = vmatprep.subr.bf16.mxu0 0
        %716 = vmatpush1.bf16.msra.mxu0 %v713
        %717 = vmatprep.subr.bf16.mxu0 0
        %718 = vmatpush1.bf16.msra.mxu0 0
        %719 = vmatprep.subr.bf16.mxu0 0
        %720 = vmatpush1.bf16.msra.mxu0 0
        %721 = vmatprep.subr.bf16.mxu0 0
        %722 = vmatpush1.bf16.msra.mxu0 0
        %723 = vmatprep.subr.bf16.mxu0 0
        %724 = vmatpush1.bf16.msra.mxu0 0
        %725 = vmatprep.subr.bf16.mxu0 0
        %726 = vmatpush1.bf16.msra.mxu0 0
        %727 = vmatprep.subr.bf16.mxu0 0
        %728 = vmatpush1.bf16.msra.mxu0 0
        %729 = vmatprep.subr.bf16.mxu0 0
        %730 = vmatpush1.bf16.msra.mxu0 0
        %731 = vmatprep.subr.bf16.mxu0 0
        %732 = vmatpush1.bf16.msra.mxu0 0
        %733 = vmatprep.subr.bf16.mxu0 0
        %734 = vmatpush1.bf16.msra.mxu0 0
        %735 = vmatprep.subr.bf16.mxu0 0
        %736 = vmatpush1.bf16.msra.mxu0 0
        %737 = vmatprep.subr.bf16.mxu0 0
        %738 = vmatpush1.bf16.msra.mxu0 0
        %739 = vmatprep.subr.bf16.mxu0 0
        %740 = vmatpush1.bf16.msra.mxu0 0
        %741 = vmatprep.subr.bf16.mxu0 0
        %742 = vmatpush1.bf16.msra.mxu0 0
        %743 = vmatprep.subr.bf16.mxu0 0
        %744 = vmatpush1.bf16.msra.mxu0 0
        %745 = vmatprep.subr.bf16.mxu0 0
        %746 = vmatpush1.bf16.msra.mxu0 0
        %747 = vmatprep.mubr.bf16.mxu0 0
        %748 = vmatmul.mubr.bf16.gmra.mrb[0].mxu0 %v709
        %v749 = vpop.f32.mrb[0].mxu0
        %v750 = vadd.f32 0.0, %v749
        %v751 = vpop.f32.mrb[0].mxu0
        %v752 = vpop.f32.mrb[0].mxu0
        %v753 = vpop.f32.mrb[0].mxu0
        %754 = vdwg.mxu0
        %756 = vrot.lane.b32.xlu0 %v642, 120
        %v757 = vpop.permute.xlu0 %756
        %758 = vrot.lane.b32.xlu0 %v643, 120
        %v759 = vpop.permute.xlu0 %758
        %v761 = vsel %vm646, %v757, 0
        %v764 = vsel %vm646, %v759, 0
        %766 = vmatprep.subr.bf16.mxu0 0
        %767 = vmatpush1.bf16.xpose.msra.mxu0 %v764
        %768 = vmatprep.subr.bf16.mxu0 0
        %769 = vmatpush1.bf16.xpose.msra.mxu0 0
        %770 = vmatprep.subr.bf16.mxu0 0
        %771 = vmatpush1.bf16.xpose.msra.mxu0 0
        %772 = vmatprep.subr.bf16.mxu0 0
        %773 = vmatpush1.bf16.xpose.msra.mxu0 0
        %774 = vmatprep.subr.bf16.mxu0 0
        %775 = vmatpush1.bf16.xpose.msra.mxu0 0
        %776 = vmatprep.subr.bf16.mxu0 0
        %777 = vmatpush1.bf16.xpose.msra.mxu0 0
        %778 = vmatprep.subr.bf16.mxu0 0
        %779 = vmatpush1.bf16.xpose.msra.mxu0 0
        %780 = vmatprep.subr.bf16.mxu0 0
        %781 = vmatpush1.bf16.xpose.msra.mxu0 0
        %782 = vmatprep.subr.bf16.mxu0 0
        %783 = vmatpush1.bf16.xpose.msra.mxu0 0
        %784 = vmatprep.subr.bf16.mxu0 0
        %785 = vmatpush1.bf16.xpose.msra.mxu0 0
        %786 = vmatprep.subr.bf16.mxu0 0
        %787 = vmatpush1.bf16.xpose.msra.mxu0 0
        %788 = vmatprep.subr.bf16.mxu0 0
        %789 = vmatpush1.bf16.xpose.msra.mxu0 0
        %790 = vmatprep.subr.bf16.mxu0 0
        %791 = vmatpush1.bf16.xpose.msra.mxu0 0
        %792 = vmatprep.subr.bf16.mxu0 0
        %793 = vmatpush1.bf16.xpose.msra.mxu0 0
        %794 = vmatprep.subr.bf16.mxu0 0
        %795 = vmatpush1.bf16.xpose.msra.mxu0 0
        %796 = vmatprep.subr.bf16.mxu0 0
        %797 = vmatpush1.bf16.xpose.msra.mxu0 0
        %798 = vmatprep.mubr.bf16.mxu0 0
        %799 = vmatmul.mubr.bf16.gmra.mrb[0].mxu0 %v761
        %v800 = vpop.f32.mrb[0].mxu0
        %v801 = vadd.f32 %v645, %v800
        %v802 = vpop.f32.mrb[0].mxu0
        %v803 = vpop.f32.mrb[0].mxu0
        %v804 = vpop.f32.mrb[0].mxu0
        %805 = vdwg.mxu0
        %v806 = vsel %vm646, %v801, -inf
        %807 = vmax.xlane.f32.xlu0 %v806
        %v808 = vpop.xlane.xlu0 %807
        %v809 = vsub.f32 %v801, %v808
        %v810 = vmul.f32 %v809, 1.442695
        %v811 = vpow.pop %v810
        %v812 = vsel %vm646, %v811, 0.0
        %813 = vadd.xlane.f32.xlu0 %v812
        %v814 = vpop.xlane.xlu0 %813
        %v815 = vrcp.pop %v814
        %v816 = vmul.f32 %v811, %v815
        %v817 = vpack.c.bf16 %v816, %v816
        %818 = vrot.lane.b32.xlu0 %v643, 88
        %v819 = vpop.permute.xlu0 %818
        %v821 = vsel %vm646, %v817, 0
        %v824 = vsel %vm711, %v819, 0
        %826 = vmatprep.subr.bf16.mxu0 0
        %827 = vmatpush1.bf16.msra.mxu0 %v824
        %828 = vmatprep.subr.bf16.mxu0 0
        %829 = vmatpush1.bf16.msra.mxu0 0
        %830 = vmatprep.subr.bf16.mxu0 0
        %831 = vmatpush1.bf16.msra.mxu0 0
        %832 = vmatprep.subr.bf16.mxu0 0
        %833 = vmatpush1.bf16.msra.mxu0 0
        %834 = vmatprep.subr.bf16.mxu0 0
        %835 = vmatpush1.bf16.msra.mxu0 0
        %836 = vmatprep.subr.bf16.mxu0 0
        %837 = vmatpush1.bf16.msra.mxu0 0
        %838 = vmatprep.subr.bf16.mxu0 0
        %839 = vmatpush1.bf16.msra.mxu0 0
        %840 = vmatprep.subr.bf16.mxu0 0
        %841 = vmatpush1.bf16.msra.mxu0 0
        %842 = vmatprep.subr.bf16.mxu0 0
        %843 = vmatpush1.bf16.msra.mxu0 0
        %844 = vmatprep.subr.bf16.mxu0 0
        %845 = vmatpush1.bf16.msra.mxu0 0
        %846 = vmatprep.subr.bf16.mxu0 0
        %847 = vmatpush1.bf16.msra.mxu0 0
        %848 = vmatprep.subr.bf16.mxu0 0
        %849 = vmatpush1.bf16.msra.mxu0 0
        %850 = vmatprep.subr.bf16.mxu0 0
        %851 = vmatpush1.bf16.msra.mxu0 0
        %852 = vmatprep.subr.bf16.mxu0 0
        %853 = vmatpush1.bf16.msra.mxu0 0
        %854 = vmatprep.subr.bf16.mxu0 0
        %855 = vmatpush1.bf16.msra.mxu0 0
        %856 = vmatprep.subr.bf16.mxu0 0
        %857 = vmatpush1.bf16.msra.mxu0 0
        %858 = vmatprep.mubr.bf16.mxu0 0
        %859 = vmatmul.mubr.bf16.gmra.mrb[0].mxu0 %v821
        %v860 = vpop.f32.mrb[0].mxu0
        %v861 = vadd.f32 0.0, %v860
        %v862 = vpop.f32.mrb[0].mxu0
        %v863 = vpop.f32.mrb[0].mxu0
        %v864 = vpop.f32.mrb[0].mxu0
        %865 = vdwg.mxu0
        %866 = vrot.lane.b32.xlu0 %v642, 112
        %v867 = vpop.permute.xlu0 %866
        %868 = vrot.lane.b32.xlu0 %v643, 112
        %v869 = vpop.permute.xlu0 %868
        %v871 = vsel %vm646, %v867, 0
        %v874 = vsel %vm646, %v869, 0
        %876 = vmatprep.subr.bf16.mxu0 0
        %877 = vmatpush1.bf16.xpose.msra.mxu0 %v874
        %878 = vmatprep.subr.bf16.mxu0 0
        %879 = vmatpush1.bf16.xpose.msra.mxu0 0
        %880 = vmatprep.subr.bf16.mxu0 0
        %881 = vmatpush1.bf16.xpose.msra.mxu0 0
        %882 = vmatprep.subr.bf16.mxu0 0
        %883 = vmatpush1.bf16.xpose.msra.mxu0 0
        %884 = vmatprep.subr.bf16.mxu0 0
        %885 = vmatpush1.bf16.xpose.msra.mxu0 0
        %886 = vmatprep.subr.bf16.mxu0 0
        %887 = vmatpush1.bf16.xpose.msra.mxu0 0
        %888 = vmatprep.subr.bf16.mxu0 0
        %889 = vmatpush1.bf16.xpose.msra.mxu0 0
        %890 = vmatprep.subr.bf16.mxu0 0
        %891 = vmatpush1.bf16.xpose.msra.mxu0 0
        %892 = vmatprep.subr.bf16.mxu0 0
        %893 = vmatpush1.bf16.xpose.msra.mxu0 0
        %894 = vmatprep.subr.bf16.mxu0 0
        %895 = vmatpush1.bf16.xpose.msra.mxu0 0
        %896 = vmatprep.subr.bf16.mxu0 0
        %897 = vmatpush1.bf16.xpose.msra.mxu0 0
        %898 = vmatprep.subr.bf16.mxu0 0
        %899 = vmatpush1.bf16.xpose.msra.mxu0 0
        %900 = vmatprep.subr.bf16.mxu0 0
        %901 = vmatpush1.bf16.xpose.msra.mxu0 0
        %902 = vmatprep.subr.bf16.mxu0 0
        %903 = vmatpush1.bf16.xpose.msra.mxu0 0
        %904 = vmatprep.subr.bf16.mxu0 0
        %905 = vmatpush1.bf16.xpose.msra.mxu0 0
        %906 = vmatprep.subr.bf16.mxu0 0
        %907 = vmatpush1.bf16.xpose.msra.mxu0 0
        %908 = vmatprep.mubr.bf16.mxu0 0
        %909 = vmatmul.mubr.bf16.gmra.mrb[0].mxu0 %v871
        %v910 = vpop.f32.mrb[0].mxu0
        %v911 = vadd.f32 %v645, %v910
        %v912 = vpop.f32.mrb[0].mxu0
        %v913 = vpop.f32.mrb[0].mxu0
        %v914 = vpop.f32.mrb[0].mxu0
        %915 = vdwg.mxu0
        %v916 = vsel %vm646, %v911, -inf
        %917 = vmax.xlane.f32.xlu0 %v916
        %v918 = vpop.xlane.xlu0 %917
        %v919 = vsub.f32 %v911, %v918
        %v920 = vmul.f32 %v919, 1.442695
        %v921 = vpow.pop %v920
        %v922 = vsel %vm646, %v921, 0.0
        %923 = vadd.xlane.f32.xlu0 %v922
        %v924 = vpop.xlane.xlu0 %923
        %v925 = vrcp.pop %v924
        %v926 = vmul.f32 %v921, %v925
        %v927 = vpack.c.bf16 %v926, %v926
        %928 = vrot.lane.b32.xlu0 %v643, 80
        %v929 = vpop.permute.xlu0 %928
        %v931 = vsel %vm646, %v927, 0
        %v934 = vsel %vm711, %v929, 0
        %936 = vmatprep.subr.bf16.mxu0 0
        %937 = vmatpush1.bf16.msra.mxu0 %v934
        %938 = vmatprep.subr.bf16.mxu0 0
        %939 = vmatpush1.bf16.msra.mxu0 0
        %940 = vmatprep.subr.bf16.mxu0 0
        %941 = vmatpush1.bf16.msra.mxu0 0
        %942 = vmatprep.subr.bf16.mxu0 0
        %943 = vmatpush1.bf16.msra.mxu0 0
        %944 = vmatprep.subr.bf16.mxu0 0
        %945 = vmatpush1.bf16.msra.mxu0 0
        %946 = vmatprep.subr.bf16.mxu0 0
        %947 = vmatpush1.bf16.msra.mxu0 0
        %948 = vmatprep.subr.bf16.mxu0 0
        %949 = vmatpush1.bf16.msra.mxu0 0
        %950 = vmatprep.subr.bf16.mxu0 0
        %951 = vmatpush1.bf16.msra.mxu0 0
        %952 = vmatprep.subr.bf16.mxu0 0
        %953 = vmatpush1.bf16.msra.mxu0 0
        %954 = vmatprep.subr.bf16.mxu0 0
        %955 = vmatpush1.bf16.msra.mxu0 0
        %956 = vmatprep.subr.bf16.mxu0 0
        %957 = vmatpush1.bf16.msra.mxu0 0
        %958 = vmatprep.subr.bf16.mxu0 0
        %959 = vmatpush1.bf16.msra.mxu0 0
        %960 = vmatprep.subr.bf16.mxu0 0
        %961 = vmatpush1.bf16.msra.mxu0 0
        %962 = vmatprep.subr.bf16.mxu0 0
        %963 = vmatpush1.bf16.msra.mxu0 0
        %964 = vmatprep.subr.bf16.mxu0 0
        %965 = vmatpush1.bf16.msra.mxu0 0
        %966 = vmatprep.subr.bf16.mxu0 0
        %967 = vmatpush1.bf16.msra.mxu0 0
        %968 = vmatprep.mubr.bf16.mxu0 0
        %969 = vmatmul.mubr.bf16.gmra.mrb[0].mxu0 %v931
        %v970 = vpop.f32.mrb[0].mxu0
        %v971 = vadd.f32 0.0, %v970
        %v972 = vpop.f32.mrb[0].mxu0
        %v973 = vpop.f32.mrb[0].mxu0
        %v974 = vpop.f32.mrb[0].mxu0
        %975 = vdwg.mxu0
        %976 = vrot.lane.b32.xlu0 %v642, 104
        %v977 = vpop.permute.xlu0 %976
        %978 = vrot.lane.b32.xlu0 %v643, 104
        %v979 = vpop.permute.xlu0 %978
        %v981 = vsel %vm646, %v977, 0
        %v984 = vsel %vm646, %v979, 0
        %986 = vmatprep.subr.bf16.mxu0 0
        %987 = vmatpush1.bf16.xpose.msra.mxu0 %v984
        %988 = vmatprep.subr.bf16.mxu0 0
        %989 = vmatpush1.bf16.xpose.msra.mxu0 0
        %990 = vmatprep.subr.bf16.mxu0 0
        %991 = vmatpush1.bf16.xpose.msra.mxu0 0
        %992 = vmatprep.subr.bf16.mxu0 0
        %993 = vmatpush1.bf16.xpose.msra.mxu0 0
        %994 = vmatprep.subr.bf16.mxu0 0
        %995 = vmatpush1.bf16.xpose.msra.mxu0 0
        %996 = vmatprep.subr.bf16.mxu0 0
        %997 = vmatpush1.bf16.xpose.msra.mxu0 0
        %998 = vmatprep.subr.bf16.mxu0 0
        %999 = vmatpush1.bf16.xpose.msra.mxu0 0
        %1000 = vmatprep.subr.bf16.mxu0 0
        %1001 = vmatpush1.bf16.xpose.msra.mxu0 0
        %1002 = vmatprep.subr.bf16.mxu0 0
        %1003 = vmatpush1.bf16.xpose.msra.mxu0 0
        %1004 = vmatprep.subr.bf16.mxu0 0
        %1005 = vmatpush1.bf16.xpose.msra.mxu0 0
        %1006 = vmatprep.subr.bf16.mxu0 0
        %1007 = vmatpush1.bf16.xpose.msra.mxu0 0
        %1008 = vmatprep.subr.bf16.mxu0 0
        %1009 = vmatpush1.bf16.xpose.msra.mxu0 0
        %1010 = vmatprep.subr.bf16.mxu0 0
        %1011 = vmatpush1.bf16.xpose.msra.mxu0 0
        %1012 = vmatprep.subr.bf16.mxu0 0
        %1013 = vmatpush1.bf16.xpose.msra.mxu0 0
        %1014 = vmatprep.subr.bf16.mxu0 0
        %1015 = vmatpush1.bf16.xpose.msra.mxu0 0
        %1016 = vmatprep.subr.bf16.mxu0 0
        %1017 = vmatpush1.bf16.xpose.msra.mxu0 0
        %1018 = vmatprep.mubr.bf16.mxu0 0
        %1019 = vmatmul.mubr.bf16.gmra.mrb[0].mxu0 %v981
        %v1020 = vpop.f32.mrb[0].mxu0
        %v1021 = vadd.f32 %v645, %v1020
        %v1022 = vpop.f32.mrb[0].mxu0
        %v1023 = vpop.f32.mrb[0].mxu0
        %v1024 = vpop.f32.mrb[0].mxu0
        %1025 = vdwg.mxu0
        %v1026 = vsel %vm646, %v1021, -inf
        %1027 = vmax.xlane.f32.xlu0 %v1026
        %v1028 = vpop.xlane.xlu0 %1027
        %v1029 = vsub.f32 %v1021, %v1028
        %v1030 = vmul.f32 %v1029, 1.442695
        %v1031 = vpow.pop %v1030
        %v1032 = vsel %vm646, %v1031, 0.0
        %1033 = vadd.xlane.f32.xlu0 %v1032
        %v1034 = vpop.xlane.xlu0 %1033
        %v1035 = vrcp.pop %v1034
        %v1036 = vmul.f32 %v1031, %v1035
        %v1037 = vpack.c.bf16 %v1036, %v1036
        %1038 = vrot.lane.b32.xlu0 %v643, 72
        %v1039 = vpop.permute.xlu0 %1038
        %v1041 = vsel %vm646, %v1037, 0
        %v1044 = vsel %vm711, %v1039, 0
        %1046 = vmatprep.subr.bf16.mxu0 0
        %1047 = vmatpush1.bf16.msra.mxu0 %v1044
        %1048 = vmatprep.subr.bf16.mxu0 0
        %1049 = vmatpush1.bf16.msra.mxu0 0
        %1050 = vmatprep.subr.bf16.mxu0 0
        %1051 = vmatpush1.bf16.msra.mxu0 0
        %1052 = vmatprep.subr.bf16.mxu0 0
        %1053 = vmatpush1.bf16.msra.mxu0 0
        %1054 = vmatprep.subr.bf16.mxu0 0
        %1055 = vmatpush1.bf16.msra.mxu0 0
        %1056 = vmatprep.subr.bf16.mxu0 0
        %1057 = vmatpush1.bf16.msra.mxu0 0
        %1058 = vmatprep.subr.bf16.mxu0 0
        %1059 = vmatpush1.bf16.msra.mxu0 0
        %1060 = vmatprep.subr.bf16.mxu0 0
        %1061 = vmatpush1.bf16.msra.mxu0 0
        %1062 = vmatprep.subr.bf16.mxu0 0
        %1063 = vmatpush1.bf16.msra.mxu0 0
        %1064 = vmatprep.subr.bf16.mxu0 0
        %1065 = vmatpush1.bf16.msra.mxu0 0
        %1066 = vmatprep.subr.bf16.mxu0 0
        %1067 = vmatpush1.bf16.msra.mxu0 0
        %1068 = vmatprep.subr.bf16.mxu0 0
        %1069 = vmatpush1.bf16.msra.mxu0 0
        %1070 = vmatprep.subr.bf16.mxu0 0
        %1071 = vmatpush1.bf16.msra.mxu0 0
        %1072 = vmatprep.subr.bf16.mxu0 0
        %1073 = vmatpush1.bf16.msra.mxu0 0
        %1074 = vmatprep.subr.bf16.mxu0 0
        %1075 = vmatpush1.bf16.msra.mxu0 0
        %1076 = vmatprep.subr.bf16.mxu0 0
        %1077 = vmatpush1.bf16.msra.mxu0 0
        %1078 = vmatprep.mubr.bf16.mxu0 0
        %1079 = vmatmul.mubr.bf16.gmra.mrb[0].mxu0 %v1041
        %v1080 = vpop.f32.mrb[0].mxu0
        %v1081 = vadd.f32 0.0, %v1080
        %v1082 = vpop.f32.mrb[0].mxu0
        %v1083 = vpop.f32.mrb[0].mxu0
        %v1084 = vpop.f32.mrb[0].mxu0
        %1085 = vdwg.mxu0
        %1087 = vrot.lane.b32.xlu0 %v861, 8
        %v1088 = vpop.permute.xlu0 %1087
        %1091 = vrot.lane.b32.xlu0 %v971, 16
        %v1092 = vpop.permute.xlu0 %1091
        %1095 = vrot.lane.b32.xlu0 %v1081, 24
        %v1096 = vpop.permute.xlu0 %1095
        %v1098 = vsel %vm646, %v750, %v1088
        %vm1099 = vcmask 130048
        %v1100 = vsel %vm1099, %v1098, %v1092
        %vm1101 = vcmask 195584
        %v1102 = vsel %vm1101, %v1100, %v1096
        %v1103 = vpack.c.bf16 %v1102, %v1102
        %v1104 = vld [vmem:[#allocation10] sm:$0xf]
        %v1105 = vld [vmem:[#allocation10 + $0x4] sm:$0xf]
        %v1106 = vld [vmem:[#allocation10 + $0x8] sm:$0xf]
        %v1107 = vld [vmem:[#allocation10 + $0xc] sm:$0xf]
        %v1108 = vld [vmem:[%s8] sm:$0x1]
        %v1110 = vlaneseq
        %v1111 = vshrl.u32 %v1110, 7
        %v1112 = vsub.s32 0, %v1111
        %v1113 = vrot.slane %v1108, %v1112
        %v1119 = vunpack.c.l.b16 %v1104
        %v1120 = vunpack.c.l.b16 %v1105
        %v1121 = vunpack.c.l.b16 %v1106
        %v1122 = vunpack.c.l.b16 %v1107
        %v1123 = vpack.c.b16 %v1120, %v1119
        %v1124 = vpack.c.b16 %v1122, %v1121
        %v1128 = vsel %vm530, %v1103, 0
        %1130 = vmatprep.subr.bf16.mxu0 0
        %1131 = vmatpush1.bf16.msra.mxu0 %v1123
        %1132 = vmatprep.subr.bf16.mxu0 0
        %1133 = vmatpush1.bf16.msra.mxu0 %v1124
        %1134 = vmatprep.subr.bf16.mxu0 0
        %1135 = vmatpush1.bf16.msra.mxu0 0
        %1136 = vmatprep.subr.bf16.mxu0 0
        %1137 = vmatpush1.bf16.msra.mxu0 0
        %1138 = vmatprep.subr.bf16.mxu0 0
        %1139 = vmatpush1.bf16.msra.mxu0 0
        %1140 = vmatprep.subr.bf16.mxu0 0
        %1141 = vmatpush1.bf16.msra.mxu0 0
        %1142 = vmatprep.subr.bf16.mxu0 0
        %1143 = vmatpush1.bf16.msra.mxu0 0
        %1144 = vmatprep.subr.bf16.mxu0 0
        %1145 = vmatpush1.bf16.msra.mxu0 0
        %1146 = vmatprep.subr.bf16.mxu0 0
        %1147 = vmatpush1.bf16.msra.mxu0 0
        %1148 = vmatprep.subr.bf16.mxu0 0
        %1149 = vmatpush1.bf16.msra.mxu0 0
        %1150 = vmatprep.subr.bf16.mxu0 0
        %1151 = vmatpush1.bf16.msra.mxu0 0
        %1152 = vmatprep.subr.bf16.mxu0 0
        %1153 = vmatpush1.bf16.msra.mxu0 0
        %1154 = vmatprep.subr.bf16.mxu0 0
        %1155 = vmatpush1.bf16.msra.mxu0 0
        %1156 = vmatprep.subr.bf16.mxu0 0
        %1157 = vmatpush1.bf16.msra.mxu0 0
        %1158 = vmatprep.subr.bf16.mxu0 0
        %1159 = vmatpush1.bf16.msra.mxu0 0
        %1160 = vmatprep.subr.bf16.mxu0 0
        %1161 = vmatpush1.bf16.msra.mxu0 0
        %1162 = vmatprep.mubr.bf16.mxu0 0
        %1163 = vmatmul.mubr.bf16.gmra.mrb[0].mxu0 %v1128
        %v1164 = vpop.f32.mrb[0].mxu0
        %v1165 = vadd.f32 %v1113, %v1164
        %v1166 = vpop.f32.mrb[0].mxu0
        %v1167 = vpop.f32.mrb[0].mxu0
        %v1168 = vpop.f32.mrb[0].mxu0
        %1169 = vdwg.mxu0
        %v1170 = vadd.f32 %v503, %v1165
        %v1171 = vsel %vm530, %v1170, 0.0
        %1172 = vadd.xlane.f32.xlu0 %v1171
        %v1173 = vpop.xlane.xlu0 %1172
        %v1174 = vrcp.pop 32.0
        %v1175 = vmul.f32 %v1173, %v1174
        %v1176 = vsub.f32 %v1170, %v1175
        %v1177 = vmul.f32 %v1176, %v1176
        %v1178 = vsel %vm530, %v1177, 0.0
        %1179 = vadd.xlane.f32.xlu0 %v1178
        %v1180 = vpop.xlane.xlu0 %1179
        %v1181 = vmul.f32 %v1180, %v1174
        %v1182 = vadd.f32 %v1181, 1e-05
        %v1183 = vrsqrt.pop %v1182
        %v1184 = vmul.f32 %v1176, %v1183
        %v1185 = vld [vmem:[%s9] sm:$0x1]
        %v1187 = vlaneseq
        %v1188 = vshrl.u32 %v1187, 7
        %v1189 = vsub.s32 0, %v1188
        %v1190 = vrot.slane %v1185, %v1189
        %v1192 = vmul.f32 %v1184, %v1190
        %v1193 = vld [vmem:[%s10] sm:$0x1]
        %v1195 = vlaneseq
        %v1196 = vshrl.u32 %v1195, 7
        %v1197 = vsub.s32 0, %v1196
        %v1198 = vrot.slane %v1193, %v1197
        %v1200 = vadd.f32 %v1192, %v1198
        %1201 = vst.msk [vmem:[%s501] sm:$0xff] %vm530, %v1200
        %s1202 = sand.u32 %s286, 1
        %s1203 = scalar_lea.sflag [#allocation4], %s1202
        %s1204 = sand.u32 %s286, 1
        %s1205 = smul.addr %s1204, 8
        %s1206 = scalar_lea.vmem [#allocation11], %s1205
        // Predicated region
        $region85: #{tpu_custom_call.1} parent=63 // pred_check
          %p1207 = pneg %p296
        $region86: #{tpu_custom_call.1} parent=63 // pred_check_branch
          %1209 = sbr.rel (%p1207) target = $region88
        $region87: #{tpu_custom_call.1} parent=63 // pred_region
          %s1211 = ssub.s32 128, 128
          %1212 = vsyncadd %s1203, %s1211
          %s1213 = smul.addr %s32, 128
          %s1214 = scalar_lea.hbm %s11, %s1213
          %s1216 = sshll.u32 %s1206, 4
          %s1217 = int_to_ptr.vmem [resolvable:$true] %s1216
          %1219 = dma.vmem_to_hbm [thread:$0]  %s1217, 128, %s1214, %s1203
        $region88: #{tpu_custom_call.1} parent=63 // pred_fallthru
          _
      $region64: #{tpu_custom_call.1} parent=5 // pred_fallthru
        _
      %p1220 = scmp.le.s32.totalorder 2, %s27
      // Predicated region
      $region89: #{tpu_custom_call.1} parent=5 // pred_check
        %p1221 = pneg %p1220
      $region90: #{tpu_custom_call.1} parent=5 // pred_check_branch
        %1223 = sbr.rel (%p1221) target = $region92
      $region91: #{tpu_custom_call.1} parent=5 // pred_region
        %s1224 = ssub.s32 %s27, 2
        // Predicated region
        $region93: #{tpu_custom_call.1} parent=91 // pred_check
          %p1225 = pneg %p302
        $region94: #{tpu_custom_call.1} parent=91 // pred_check_branch
          %1227 = sbr.rel (%p1225) target = $region96
        $region95: #{tpu_custom_call.1} parent=91 // pred_region
          %s1228 = sand.u32 %s287, 1
          %s1229 = scalar_lea.sflag [#allocation4], %s1228
          %s1230 = sand.u32 %s287, 1
          %s1231 = smul.addr %s1230, 8
          %s1232 = scalar_lea.vmem [#allocation11], %s1231
          %1233 = dma.done %s1229, 128
        $region96: #{tpu_custom_call.1} parent=91 // pred_fallthru
          _
      $region92: #{tpu_custom_call.1} parent=5 // pred_fallthru
        _
    $region6: #{tpu_custom_call.1} parent=1 // loop_footer
      %s31 = sadd.s32 1, %s27
    $region7: #{tpu_custom_call.1} parent=1 // loop_footer_branch
      %26 = sbr.rel target = $region3
    $region8: #{tpu_custom_call.1} parent=1 // loop_exit
      _
    %1234 = vsyncpa [#allocation3], 1
    %s1235 = scalar_lea.sflag [#allocation3], 1
    %1236 = vsyncpa %s1235, 1
    %1237 = vsyncpa [#allocation6], 1
    %s1238 = scalar_lea.sflag [#allocation6], 1
    %1239 = vsyncpa %s1238, 1
    %1240 = vsyncpa [#allocation9], 1
    %1241 = vsyncpa [#allocation4], 1
    %s1242 = scalar_lea.sflag [#allocation4], 1
    %1243 = vsyncpa %s1242, 1

</llo_original>
